<compile_context>
chip_gen: v5e
topology: v5e:2x2
jax: 0.10.0
libtpu: 0.0.40
codegen_flags: <defaults>
</compile_context>

<pallas_src>
import functools

import jax
import jax.numpy as jnp
from jax.experimental import pallas as pl
from jax.experimental.pallas import tpu as pltpu

EPS = 1e-8
_HI = jax.lax.Precision.HIGHEST


def _sigmoid_fast(x, *, bf16=False):
    """sigmoid(x) = 1/(1+exp(-x)) with exp and reciprocal both on the EUP slot."""
    if bf16:
        e = jnp.exp(-(x.astype(jnp.bfloat16))).astype(jnp.float32)
    else:
        e = jnp.exp(-x)
    return pl.reciprocal(1.0 + e, approx=True)


def gvc_kernel(coef_ref,                                     # SMEM scalars (12,)
               pos_i_ref, a_i_ref, scale_i_ref,              # i-side tiles
               pos_j_ref, pos_jt_ref, b_jt_ref, mask_jr_ref,  # j-side tiles
               wsn_ref, wg_ref,                               # tiny VMEM params
               nf_out_ref, pos_out_ref,                       # outputs
               nf_acc, sumw_acc, pv_acc,                      # VMEM scratch
               *, gate_bf16=False):
    j = pl.program_id(2)
    nj = pl.num_programs(2)

    pos_i = pos_i_ref[0]        # (TI, 3)
    pos_j = pos_j_ref[0]        # (TJ, 3)
    pos_jt = pos_jt_ref[0]      # (3, TJ)
    a_i = a_i_ref[0]            # (TI, D)   nf_i @ Ws[:, :D].T + bs  (host-precomputed)
    b_jt = b_jt_ref[0]          # (D, TJ)   (nf_j @ Ws[:, D:2D].T).T (host-precomputed)
    mj = mask_jr_ref[0]         # (1, TJ)

    # ---- per-(n, i) init: zero accumulators -------------------------------------
    @pl.when(j == 0)
    def _init():
        nf_acc[...] = jnp.zeros_like(nf_acc)
        sumw_acc[...] = jnp.zeros_like(sumw_acc)
        pv_acc[...] = jnp.zeros_like(pv_acc)

    # ---- host-precomputed scalar coefficients (SMEM) ----------------------------
    a2_0, a2_1, a2_2 = coef_ref[0], coef_ref[1], coef_ref[2]
    ab_0, ab_1, ab_2 = coef_ref[3], coef_ref[4], coef_ref[5]
    b2_0, b2_1, b2_2 = coef_ref[6], coef_ref[7], coef_ref[8]
    alpha, beta, bg = coef_ref[9], coef_ref[10], coef_ref[11]

    # ---- pair geometry, lane-dense (TI, TJ) planes -------------------------------
    ni2 = jnp.sum(pos_i * pos_i, axis=-1, keepdims=True)          # (TI, 1)
    nj2 = jnp.sum(pos_jt * pos_jt, axis=0, keepdims=True)         # (1, TJ)
    dotp = jnp.dot(pos_i, pos_jt, precision=_HI,
                   preferred_element_type=jnp.float32)            # (TI, TJ)  MXU
    # Cancellation can make the quadratic form slightly negative; the EPS clamp
    # matches the reference's clamp(min=eps) for the forward pass.
    vn0 = jnp.sqrt(jnp.maximum(a2_0 * ni2 + ab_0 * dotp + b2_0 * nj2, EPS))
    vn1 = jnp.sqrt(jnp.maximum(a2_1 * ni2 + ab_1 * dotp + b2_1 * nj2, EPS))
    vn2 = jnp.sqrt(jnp.maximum(a2_2 * ni2 + ab_2 * dotp + b2_2 * nj2, EPS))

    # ---- scalar branch s[i, d, j]: (TI, D, TJ) slab with TJ on lanes -------------
    wsn = wsn_ref[...]                                            # (D, 3)
    s = (a_i[:, :, None] + b_jt[None, :, :]
         + wsn[:, 0:1][None, :, :] * vn0[:, None, :]
         + wsn[:, 1:2][None, :, :] * vn1[:, None, :]
         + wsn[:, 2:3][None, :, :] * vn2[:, None, :])             # (TI, D, TJ)

    # ---- gate path (vector output weight) ---------------------------------------
    sig = _sigmoid_fast(s, bf16=gate_bf16)                        # (TI, D, TJ) EUP
    gate_lin = jnp.sum(sig * wg_ref[...][None, :, :], axis=1) + bg   # (TI, TJ)
    wgt = mj * jax.nn.sigmoid(gate_lin)                           # (TI, TJ) j-masked
    sumw_acc[...] += jnp.sum(wgt, axis=1, keepdims=True)          # (TI, 1)
    pv_acc[...] += jnp.dot(wgt, pos_j, precision=_HI,
                           preferred_element_type=jnp.float32)    # (TI, 3)  MXU

    # ---- scalar output: masked relu, summed over j -> (TI, D) --------------------
    nf_acc[...] += jnp.sum(jnp.maximum(s, 0.0) * mj[None, :, :], axis=2)

    # ---- finalize: apply (mask_i / node_num), write outputs ----------------------
    @pl.when(j == nj - 1)
    def _fin():
        scale = scale_i_ref[0]                                    # (TI, 1)
        nf_out_ref[0] = (nf_acc[...] * scale).astype(nf_out_ref.dtype)
        pos_out_ref[0] = ((alpha * sumw_acc[...] * pos_i
                           + beta * pv_acc[...]) * scale).astype(pos_out_ref.dtype)


def _pick_tile(length, pref, align):
    """Largest tile <= pref that is a multiple of `align` and divides `length`
    (falls back to the full length, which is always a legal block dim)."""
    if length <= pref:
        return length
    if length % pref == 0:
        return pref
    t = (pref // align) * align
    while t >= align:
        if length % t == 0:
            return t
        t -= align
    return length


def gvc_block_forward(pos, node_feat, mask, params, *, ti=None, tj=None,
                      gate_bf16=False, vmem_limit_bytes=48 * 1024 * 1024):
    """Pallas implementation of GVCBlock.forward (pair_feat=None).

    gate_bf16=True runs the slab sigmoid's exp in bf16 (v6e/v7x only — their
    EUP/VPU are bf16-native); keep False on v5e and older.
    """
    N, L, D = node_feat.shape
    wh, ws, bs, wv, wsv, bsv = params

    pos = pos.astype(jnp.float32)
    node_feat = node_feat.astype(jnp.float32)
    maskf = mask.astype(jnp.float32)

    # ---- tile selection ----------------------------------------------------------
    if tj is None:
        tj = _pick_tile(L, 128, 128)          # lane axis: multiple of 128 or full L
    if ti is None:
        pref = 128
        # keep the live (ti, D, tj) f32 slabs comfortably inside the scoped VMEM
        while pref > 8 and 4 * pref * D * tj * 4 > vmem_limit_bytes // 2:
            pref //= 2
        ti = _pick_tile(L, max(pref, 8), 8)   # sublane axis: multiple of 8 or full L
    assert L % ti == 0 and L % tj == 0, "L must be divisible by the tile sizes"
    # Give megacore (v7x: 2 TensorCores) at least two parallel programs.
    if N * (L // ti) < 2:
        half = ti // 2
        if half >= 8 and half % 8 == 0 and L % half == 0:
            ti = half
    # TODO(synk): pad L to a tile multiple for arbitrary (non-divisible) lengths.

    # ---- host-side parameter prep (tiny algebra + K=D GEMMs hoisted out) ---------
    a = wh[:, 0] + wh[:, 2]                      # (3,) coeff on p_i per h channel
    b = wh[:, 1] - wh[:, 2]                      # (3,) coeff on p_j per h channel
    alpha = jnp.sum(wv[0] * a)                   # scalar
    beta = jnp.sum(wv[0] * b)                    # scalar
    coef = jnp.concatenate([a * a, 2.0 * a * b, b * b,
                            alpha[None], beta[None],
                            jnp.reshape(bsv, (1,))]).astype(jnp.float32)   # (12,)

    wsa_t = ws[:, :D].T                          # (D, D) acts on nf_i
    wsb_t = ws[:, D:2 * D].T                     # (D, D) acts on nf_j
    a_feat = jnp.einsum("nld,de->nle", node_feat, wsa_t,
                        precision=_HI) + bs[None, None, :]                 # (N, L, D)
    b_feat_t = jnp.swapaxes(
        jnp.einsum("nld,de->nle", node_feat, wsb_t, precision=_HI), 1, 2)  # (N, D, L)

    wsn_p = ws[:, 2 * D:].astype(jnp.float32)    # (D, 3) acts on vn
    wg_p = wsv.reshape(D, 1).astype(jnp.float32)  # (D, 1) gate weight vector

    node_num = jnp.sum(maskf, axis=-1, keepdims=True)            # (N, 1)
    # NOTE: inf/NaN if an entire row of the mask is zero — same hazard as reference.
    scale_i = (maskf / node_num).reshape(N, L, 1)
    mask_jr = maskf.reshape(N, 1, L)
    pos_t = jnp.swapaxes(pos, 1, 2)              # (N, 3, L)

    grid = (N, L // ti, L // tj)
    const = lambda n, i, j: (0, 0)
    smem = pl.BlockSpec(memory_space=pltpu.MemorySpace.SMEM)
    kernel = functools.partial(gvc_kernel, gate_bf16=gate_bf16)

    return pl.pallas_call(
        kernel,
        out_shape=(jax.ShapeDtypeStruct((N, L, D), jnp.float32),
                   jax.ShapeDtypeStruct((N, L, 3), jnp.float32)),
        grid=grid,
        in_specs=[
            smem,                                                    # coef (12,)
            pl.BlockSpec((1, ti, 3), lambda n, i, j: (n, i, 0)),     # pos_i
            pl.BlockSpec((1, ti, D), lambda n, i, j: (n, i, 0)),     # A_i
            pl.BlockSpec((1, ti, 1), lambda n, i, j: (n, i, 0)),     # scale_i
            pl.BlockSpec((1, tj, 3), lambda n, i, j: (n, j, 0)),     # pos_j
            pl.BlockSpec((1, 3, tj), lambda n, i, j: (n, 0, j)),     # pos_j^T
            pl.BlockSpec((1, D, tj), lambda n, i, j: (n, 0, j)),     # B_j^T
            pl.BlockSpec((1, 1, tj), lambda n, i, j: (n, 0, j)),     # mask_j row
            pl.BlockSpec((D, 3), const),                             # Ws[:, 2D:]
            pl.BlockSpec((D, 1), const),                             # gate weights
        ],
        out_specs=(
            pl.BlockSpec((1, ti, D), lambda n, i, j: (n, i, 0)),
            pl.BlockSpec((1, ti, 3), lambda n, i, j: (n, i, 0)),
        ),
        scratch_shapes=[
            pltpu.VMEM((ti, D), jnp.float32),    # relu accumulator
            pltpu.VMEM((ti, 1), jnp.float32),    # sum of gated weights
            pltpu.VMEM((ti, 3), jnp.float32),    # gated-weighted pos_j sum
        ],
        compiler_params=pltpu.CompilerParams(
            dimension_semantics=("parallel", "parallel", "arbitrary"),
            vmem_limit_bytes=vmem_limit_bytes,
        ),
    )(coef, pos, a_feat, scale_i, pos, pos_t, b_feat_t, mask_jr, wsn_p, wg_p)


def gvc_block_ref(pos, node_feat, mask, params):
    """Pure-JAX dense reference mirroring the PyTorch forward."""
    wh, ws, bs, wv, wsv, bsv = params
    N, L, D = node_feat.shape
    with jax.default_matmul_precision("highest"):
        pi = jnp.broadcast_to(pos[:, :, None, :], (N, L, L, 3))
        pj = jnp.broadcast_to(pos[:, None, :, :], (N, L, L, 3))
        v = jnp.stack([pi, pj, pi - pj], axis=-2)                 # (N,L,L,3ch,3sp)
        si = jnp.broadcast_to(node_feat[:, :, None, :], (N, L, L, D))
        sj = jnp.broadcast_to(node_feat[:, None, :, :], (N, L, L, D))
        s_in = jnp.concatenate([si, sj], axis=-1)                 # (N,L,L,2D)

        vT = jnp.swapaxes(v, -1, -2)                              # (N,L,L,3sp,3ch)
        vh = vT @ wh.T                                            # (N,L,L,3sp,3h)
        vn = jnp.sqrt(jnp.maximum(jnp.sum(vh * vh, axis=-2), EPS))
        s = jnp.concatenate([s_in, vn], axis=-1) @ ws.T + bs      # (N,L,L,D)
        vout = jnp.swapaxes(vh @ wv.T, -1, -2)                    # (N,L,L,1,3)
        gate = jax.nn.sigmoid(s) @ wsv.T + bsv                    # (N,L,L,1)
        vout = vout * jax.nn.sigmoid(gate)[..., None]
        s = jax.nn.relu(s)

        mf = mask.astype(jnp.float32)
        mp = mf[:, :, None] * mf[:, None, :]                      # (N,L,L)
        n_nodes = jnp.sum(mf, axis=-1)                            # (N,)
        nf_out = jnp.sum(mp[..., None] * s, axis=2) / n_nodes[:, None, None]
        pos_out = (jnp.sum(mp[..., None] * vout[:, :, :, 0, :], axis=2)
                   / n_nodes[:, None, None])
    return nf_out, pos_out


if __name__ == "__main__":
    key = jax.random.PRNGKey(0)
    N, L, D = 2, 8, 32          # batch, seq length, node_feat_dim
    h_dim, vi, vo = 3, 3, 1     # GVP internal dims (2*node_vec_dim+1 = 3)
    si, so = 2 * D, D

    k_pos, k_nf, k_mask, k_par = jax.random.split(key, 4)
    pos = jax.random.normal(k_pos, (N, L, 3), dtype=jnp.float32)
    node_feat = jax.random.normal(k_nf, (N, L, D), dtype=jnp.float32)
    mask = (jax.random.uniform(k_mask, (N, L)) > 0.3).astype(jnp.float32)
    mask = mask.at[:, 0].set(1.0)   # ensure node_num > 0 in every batch

    def _uniform(k, shape, fan_in):
        bnd = float(fan_in) ** -0.5
        return jax.random.uniform(k, shape, jnp.float32, -bnd, bnd)

    ks = jax.random.split(k_par, 6)
    wh = _uniform(ks[0], (h_dim, vi), vi)          # Linear(vi -> h_dim), no bias
    ws = _uniform(ks[1], (so, h_dim + si), h_dim + si)
    bs = _uniform(ks[2], (so,), h_dim + si)
    wv = _uniform(ks[3], (vo, h_dim), h_dim)       # Linear(h_dim -> vo), no bias
    wsv = _uniform(ks[4], (vo, so), so)
    bsv = _uniform(ks[5], (vo,), so)
    params = (wh, ws, bs, wv, wsv, bsv)

    nf_ref, pos_ref = gvc_block_ref(pos, node_feat, mask, params)

    # f32 path (works on all TPU generations).
    nf_out, pos_out = gvc_block_forward(pos, node_feat, mask, params)
    jax.block_until_ready((nf_out, pos_out))
    assert nf_out.shape == (N, L, D) and pos_out.shape == (N, L, 3)
    assert jnp.allclose(nf_out, nf_ref, atol=2e-3, rtol=2e-3), "node_feat_out mismatch"
    assert jnp.allclose(pos_out, pos_ref, atol=2e-3, rtol=2e-3), "pos_out mismatch"

    # bf16 gate/sigmoid path: EUP is bf16-native on v6e/v7x (skip on v5e and older).
    kind = jax.devices()[0].device_kind.lower()
    if any(tag in kind for tag in ("v6", "v7", "7x")):
        nf_b, pos_b = gvc_block_forward(pos, node_feat, mask, params, gate_bf16=True)
        jax.block_until_ready((nf_b, pos_b))
        assert jnp.allclose(nf_b, nf_ref, atol=3e-2, rtol=3e-2), "bf16 nf mismatch"
        assert jnp.allclose(pos_b, pos_ref, atol=3e-2, rtol=3e-2), "bf16 pos mismatch"

    print("KERNEL_OK")
</pallas_src>

<mosaic_0001>
module attributes {stable_mosaic.version = 11 : i64} {
  func.func @gvc_kernel(%arg0: i32, %arg1: i32, %arg2: i32, %arg3: memref<12xf32, #tpu.memory_space<smem>>, %arg4: memref<1x8x3xf32, #tpu.memory_space<vmem>>, %arg5: memref<1x8x32xf32, #tpu.memory_space<vmem>>, %arg6: memref<1x8x1xf32, #tpu.memory_space<vmem>>, %arg7: memref<1x8x3xf32, #tpu.memory_space<vmem>>, %arg8: memref<1x3x8xf32, #tpu.memory_space<vmem>>, %arg9: memref<1x32x8xf32, #tpu.memory_space<vmem>>, %arg10: memref<1x1x8xf32, #tpu.memory_space<vmem>>, %arg11: memref<32x3xf32, #tpu.memory_space<vmem>>, %arg12: memref<32x1xf32, #tpu.memory_space<vmem>>, %arg13: memref<1x8x32xf32, #tpu.memory_space<vmem>>, %arg14: memref<1x8x3xf32, #tpu.memory_space<vmem>>, %arg15: memref<8x32xf32, #tpu.memory_space<vmem>>, %arg16: memref<8x1xf32, #tpu.memory_space<vmem>>, %arg17: memref<8x3xf32, #tpu.memory_space<vmem>>) attributes {dimension_semantics = [#tpu.dimension_semantics<parallel>, #tpu.dimension_semantics<parallel>, #tpu.dimension_semantics<arbitrary>], iteration_bounds = array<i64: 2, 1, 1>, scalar_prefetch = 0 : i64, scratch_operands = 3 : i64, tpu.core_type = #tpu.core_type<tc>, window_params = [{transform_indices = @transform_0, window_bounds = array<i64: 12>}, {transform_indices = @transform_1, window_bounds = array<i64: 1, 8, 3>}, {transform_indices = @transform_2, window_bounds = array<i64: 1, 8, 32>}, {transform_indices = @transform_3, window_bounds = array<i64: 1, 8, 1>}, {transform_indices = @transform_4, window_bounds = array<i64: 1, 8, 3>}, {transform_indices = @transform_5, window_bounds = array<i64: 1, 3, 8>}, {transform_indices = @transform_6, window_bounds = array<i64: 1, 32, 8>}, {transform_indices = @transform_7, window_bounds = array<i64: 1, 1, 8>}, {pipeline_mode = #tpu.pipeline_mode<synchronous>, transform_indices = @transform_8, window_bounds = array<i64: 32, 3>}, {pipeline_mode = #tpu.pipeline_mode<synchronous>, transform_indices = @transform_9, window_bounds = array<i64: 32, 1>}, {transform_indices = @transform_10, window_bounds = array<i64: 1, 8, 32>}, {transform_indices = @transform_11, window_bounds = array<i64: 1, 8, 3>}]} {
    %c0 = arith.constant 0 : index
    %c0_0 = arith.constant 0 : index
    %c0_1 = arith.constant 0 : index
    %0 = vector.load %arg4[%c0, %c0_0, %c0_1] : memref<1x8x3xf32, #tpu.memory_space<vmem>>, vector<1x8x3xf32>
    %1 = vector.shape_cast %0 : vector<1x8x3xf32> to vector<8x3xf32>
    %c0_2 = arith.constant 0 : index
    %c0_3 = arith.constant 0 : index
    %c0_4 = arith.constant 0 : index
    %2 = vector.load %arg7[%c0_2, %c0_3, %c0_4] : memref<1x8x3xf32, #tpu.memory_space<vmem>>, vector<1x8x3xf32>
    %3 = vector.shape_cast %2 : vector<1x8x3xf32> to vector<8x3xf32>
    %c0_5 = arith.constant 0 : index
    %c0_6 = arith.constant 0 : index
    %c0_7 = arith.constant 0 : index
    %4 = vector.load %arg8[%c0_5, %c0_6, %c0_7] : memref<1x3x8xf32, #tpu.memory_space<vmem>>, vector<1x3x8xf32>
    %5 = vector.shape_cast %4 : vector<1x3x8xf32> to vector<3x8xf32>
    %c0_8 = arith.constant 0 : index
    %c0_9 = arith.constant 0 : index
    %c0_10 = arith.constant 0 : index
    %6 = vector.load %arg5[%c0_8, %c0_9, %c0_10] : memref<1x8x32xf32, #tpu.memory_space<vmem>>, vector<1x8x32xf32>
    %7 = vector.shape_cast %6 : vector<1x8x32xf32> to vector<8x32xf32>
    %c0_11 = arith.constant 0 : index
    %c0_12 = arith.constant 0 : index
    %c0_13 = arith.constant 0 : index
    %8 = vector.load %arg9[%c0_11, %c0_12, %c0_13] : memref<1x32x8xf32, #tpu.memory_space<vmem>>, vector<1x32x8xf32>
    %9 = vector.shape_cast %8 : vector<1x32x8xf32> to vector<32x8xf32>
    %c0_14 = arith.constant 0 : index
    %c0_15 = arith.constant 0 : index
    %c0_16 = arith.constant 0 : index
    %10 = vector.load %arg10[%c0_14, %c0_15, %c0_16] : memref<1x1x8xf32, #tpu.memory_space<vmem>>, vector<1x1x8xf32>
    %11 = vector.shape_cast %10 : vector<1x1x8xf32> to vector<1x8xf32>
    %c0_i32 = arith.constant 0 : i32
    %12 = arith.cmpi eq, %arg2, %c0_i32 : i32
    %13 = arith.extui %12 : i1 to i32
    %c0_i32_17 = arith.constant 0 : i32
    %14 = arith.cmpi ne, %13, %c0_i32_17 : i32
    scf.if %14 {
      %cst_50 = arith.constant 0.000000e+00 : f32
      %141 = vector.broadcast %cst_50 : f32 to vector<8x32xf32>
      %c0_51 = arith.constant 0 : index
      %c0_52 = arith.constant 0 : index
      %142 = vector.load %arg15[%c0_51, %c0_52] : memref<8x32xf32, #tpu.memory_space<vmem>>, vector<8x32xf32>
      tpu.vector_store %arg15[%c0_51, %c0_52], %141 {strides = array<i32>} : memref<8x32xf32, #tpu.memory_space<vmem>>, vector<8x32xf32>,
      %cst_53 = arith.constant 0.000000e+00 : f32
      %143 = vector.broadcast %cst_53 : f32 to vector<8x1xf32>
      %c0_54 = arith.constant 0 : index
      %c0_55 = arith.constant 0 : index
      %144 = vector.load %arg16[%c0_54, %c0_55] : memref<8x1xf32, #tpu.memory_space<vmem>>, vector<8x1xf32>
      tpu.vector_store %arg16[%c0_54, %c0_55], %143 {strides = array<i32>} : memref<8x1xf32, #tpu.memory_space<vmem>>, vector<8x1xf32>,
      %cst_56 = arith.constant 0.000000e+00 : f32
      %145 = vector.broadcast %cst_56 : f32 to vector<8x3xf32>
      %c0_57 = arith.constant 0 : index
      %c0_58 = arith.constant 0 : index
      %146 = vector.load %arg17[%c0_57, %c0_58] : memref<8x3xf32, #tpu.memory_space<vmem>>, vector<8x3xf32>
      tpu.vector_store %arg17[%c0_57, %c0_58], %145 {strides = array<i32>} : memref<8x3xf32, #tpu.memory_space<vmem>>, vector<8x3xf32>,
    } else {
    }
    %c0_18 = arith.constant 0 : index
    %15 = memref.load %arg3[%c0_18] : memref<12xf32, #tpu.memory_space<smem>>
    %c1 = arith.constant 1 : index
    %16 = memref.load %arg3[%c1] : memref<12xf32, #tpu.memory_space<smem>>
    %c2 = arith.constant 2 : index
    %17 = memref.load %arg3[%c2] : memref<12xf32, #tpu.memory_space<smem>>
    %c3 = arith.constant 3 : index
    %18 = memref.load %arg3[%c3] : memref<12xf32, #tpu.memory_space<smem>>
    %c4 = arith.constant 4 : index
    %19 = memref.load %arg3[%c4] : memref<12xf32, #tpu.memory_space<smem>>
    %c5 = arith.constant 5 : index
    %20 = memref.load %arg3[%c5] : memref<12xf32, #tpu.memory_space<smem>>
    %c6 = arith.constant 6 : index
    %21 = memref.load %arg3[%c6] : memref<12xf32, #tpu.memory_space<smem>>
    %c7 = arith.constant 7 : index
    %22 = memref.load %arg3[%c7] : memref<12xf32, #tpu.memory_space<smem>>
    %c8 = arith.constant 8 : index
    %23 = memref.load %arg3[%c8] : memref<12xf32, #tpu.memory_space<smem>>
    %c9 = arith.constant 9 : index
    %24 = memref.load %arg3[%c9] : memref<12xf32, #tpu.memory_space<smem>>
    %c10 = arith.constant 10 : index
    %25 = memref.load %arg3[%c10] : memref<12xf32, #tpu.memory_space<smem>>
    %c11 = arith.constant 11 : index
    %26 = memref.load %arg3[%c11] : memref<12xf32, #tpu.memory_space<smem>>
    %27 = arith.mulf %1, %1 : vector<8x3xf32>
    %cst = arith.constant dense<0.000000e+00> : vector<8xf32>
    %28 = vector.multi_reduction <add>, %27, %cst [1] : vector<8x3xf32> to vector<8xf32>
    %29 = vector.shape_cast %28 : vector<8xf32> to vector<8x1xf32>
    %30 = arith.mulf %5, %5 : vector<3x8xf32>
    %cst_19 = arith.constant dense<0.000000e+00> : vector<8xf32>
    %31 = vector.multi_reduction <add>, %30, %cst_19 [0] : vector<3x8xf32> to vector<8xf32>
    %32 = vector.shape_cast %31 : vector<8xf32> to vector<1x8xf32>
    %cst_20 = arith.constant dense<0.000000e+00> : vector<8x8xf32>
    %33 = tpu.matmul %1, %5, %cst_20 {dimension_numbers = #tpu.dot_dimension_numbers<[1], [0], [0], [1], [0, 0, 1, 1], [], []>, precision = #tpu.contract_precision<fp32>} : vector<8x3xf32>, vector<3x8xf32>, vector<8x8xf32> -> vector<8x8xf32>
    %34 = vector.broadcast %15 : f32 to vector<8x1xf32>
    %35 = arith.mulf %34, %29 : vector<8x1xf32>
    %36 = vector.broadcast %18 : f32 to vector<8x8xf32>
    %37 = arith.mulf %36, %33 : vector<8x8xf32>
    %38 = vector.broadcast %35 : vector<8x1xf32> to vector<8x8xf32>
    %39 = arith.addf %38, %37 : vector<8x8xf32>
    %40 = vector.broadcast %21 : f32 to vector<1x8xf32>
    %41 = arith.mulf %40, %32 : vector<1x8xf32>
    %42 = vector.broadcast %41 : vector<1x8xf32> to vector<8x8xf32>
    %43 = arith.addf %39, %42 : vector<8x8xf32>
    %cst_21 = arith.constant 9.99999993E-9 : f32
    %44 = vector.broadcast %cst_21 : f32 to vector<8x8xf32>
    %45 = arith.maximumf %43, %44 : vector<8x8xf32>
    %46 = math.sqrt %45 : vector<8x8xf32>
    %47 = vector.broadcast %16 : f32 to vector<8x1xf32>
    %48 = arith.mulf %47, %29 : vector<8x1xf32>
    %49 = vector.broadcast %19 : f32 to vector<8x8xf32>
    %50 = arith.mulf %49, %33 : vector<8x8xf32>
    %51 = vector.broadcast %48 : vector<8x1xf32> to vector<8x8xf32>
    %52 = arith.addf %51, %50 : vector<8x8xf32>
    %53 = vector.broadcast %22 : f32 to vector<1x8xf32>
    %54 = arith.mulf %53, %32 : vector<1x8xf32>
    %55 = vector.broadcast %54 : vector<1x8xf32> to vector<8x8xf32>
    %56 = arith.addf %52, %55 : vector<8x8xf32>
    %cst_22 = arith.constant 9.99999993E-9 : f32
    %57 = vector.broadcast %cst_22 : f32 to vector<8x8xf32>
    %58 = arith.maximumf %56, %57 : vector<8x8xf32>
    %59 = math.sqrt %58 : vector<8x8xf32>
    %60 = vector.broadcast %17 : f32 to vector<8x1xf32>
    %61 = arith.mulf %60, %29 : vector<8x1xf32>
    %62 = vector.broadcast %20 : f32 to vector<8x8xf32>
    %63 = arith.mulf %62, %33 : vector<8x8xf32>
    %64 = vector.broadcast %61 : vector<8x1xf32> to vector<8x8xf32>
    %65 = arith.addf %64, %63 : vector<8x8xf32>
    %66 = vector.broadcast %23 : f32 to vector<1x8xf32>
    %67 = arith.mulf %66, %32 : vector<1x8xf32>
    %68 = vector.broadcast %67 : vector<1x8xf32> to vector<8x8xf32>
    %69 = arith.addf %65, %68 : vector<8x8xf32>
    %cst_23 = arith.constant 9.99999993E-9 : f32
    %70 = vector.broadcast %cst_23 : f32 to vector<8x8xf32>
    %71 = arith.maximumf %69, %70 : vector<8x8xf32>
    %72 = math.sqrt %71 : vector<8x8xf32>
    %c0_24 = arith.constant 0 : index
    %c0_25 = arith.constant 0 : index
    %73 = vector.load %arg11[%c0_24, %c0_25] : memref<32x3xf32, #tpu.memory_space<vmem>>, vector<32x3xf32>
    %74 = vector.shape_cast %7 : vector<8x32xf32> to vector<8x32x1xf32>
    %75 = vector.shape_cast %9 : vector<32x8xf32> to vector<1x32x8xf32>
    %76 = vector.broadcast %74 : vector<8x32x1xf32> to vector<8x32x8xf32>
    %77 = vector.broadcast %75 : vector<1x32x8xf32> to vector<8x32x8xf32>
    %78 = arith.addf %76, %77 : vector<8x32x8xf32>
    %79 = vector.extract_strided_slice %73 {offsets = [0, 0], sizes = [32, 1], strides = [1, 1]} : vector<32x3xf32> to vector<32x1xf32>
    %80 = vector.shape_cast %79 : vector<32x1xf32> to vector<1x32x1xf32>
    %81 = vector.shape_cast %46 : vector<8x8xf32> to vector<8x1x8xf32>
    %82 = vector.broadcast %80 : vector<1x32x1xf32> to vector<8x32x8xf32>
    %83 = vector.broadcast %81 : vector<8x1x8xf32> to vector<8x32x8xf32>
    %84 = arith.mulf %82, %83 : vector<8x32x8xf32>
    %85 = arith.addf %78, %84 : vector<8x32x8xf32>
    %86 = vector.extract_strided_slice %73 {offsets = [0, 1], sizes = [32, 1], strides = [1, 1]} : vector<32x3xf32> to vector<32x1xf32>
    %87 = vector.shape_cast %86 : vector<32x1xf32> to vector<1x32x1xf32>
    %88 = vector.shape_cast %59 : vector<8x8xf32> to vector<8x1x8xf32>
    %89 = vector.broadcast %87 : vector<1x32x1xf32> to vector<8x32x8xf32>
    %90 = vector.broadcast %88 : vector<8x1x8xf32> to vector<8x32x8xf32>
    %91 = arith.mulf %89, %90 : vector<8x32x8xf32>
    %92 = arith.addf %85, %91 : vector<8x32x8xf32>
    %93 = vector.extract_strided_slice %73 {offsets = [0, 2], sizes = [32, 1], strides = [1, 1]} : vector<32x3xf32> to vector<32x1xf32>
    %94 = vector.shape_cast %93 : vector<32x1xf32> to vector<1x32x1xf32>
    %95 = vector.shape_cast %72 : vector<8x8xf32> to vector<8x1x8xf32>
    %96 = vector.broadcast %94 : vector<1x32x1xf32> to vector<8x32x8xf32>
    %97 = vector.broadcast %95 : vector<8x1x8xf32> to vector<8x32x8xf32>
    %98 = arith.mulf %96, %97 : vector<8x32x8xf32>
    %99 = arith.addf %92, %98 : vector<8x32x8xf32>
    %cst_26 = arith.constant 0.000000e+00 : f32
    %100 = vector.broadcast %cst_26 : f32 to vector<8x32x8xf32>
    %101 = arith.subf %100, %99 : vector<8x32x8xf32>
    %102 = math.exp %101 : vector<8x32x8xf32>
    %cst_27 = arith.constant 1.000000e+00 : f32
    %103 = vector.broadcast %cst_27 : f32 to vector<8x32x8xf32>
    %104 = arith.addf %103, %102 : vector<8x32x8xf32>
    %105 = tpu.reciprocal %104 {approx = true} : vector<8x32x8xf32> -> vector<8x32x8xf32>
    %c0_28 = arith.constant 0 : index
    %c0_29 = arith.constant 0 : index
    %106 = vector.load %arg12[%c0_28, %c0_29] : memref<32x1xf32, #tpu.memory_space<vmem>>, vector<32x1xf32>
    %107 = vector.shape_cast %106 : vector<32x1xf32> to vector<1x32x1xf32>
    %108 = vector.broadcast %107 : vector<1x32x1xf32> to vector<8x32x8xf32>
    %109 = arith.mulf %105, %108 : vector<8x32x8xf32>
    %cst_30 = arith.constant dense<0.000000e+00> : vector<8x8xf32>
    %110 = vector.multi_reduction <add>, %109, %cst_30 [1] : vector<8x32x8xf32> to vector<8x8xf32>
    %111 = vector.broadcast %26 : f32 to vector<8x8xf32>
    %112 = arith.addf %110, %111 : vector<8x8xf32>
    %113 = arith.negf %112 : vector<8x8xf32>
    %114 = math.exp %113 : vector<8x8xf32>
    %cst_31 = arith.constant 1.000000e+00 : f32
    %115 = vector.broadcast %cst_31 : f32 to vector<8x8xf32>
    %116 = arith.addf %115, %114 : vector<8x8xf32>
    %117 = arith.divf %115, %116 : vector<8x8xf32>
    %118 = vector.broadcast %11 : vector<1x8xf32> to vector<8x8xf32>
    %119 = arith.mulf %118, %117 : vector<8x8xf32>
    %c0_32 = arith.constant 0 : index
    %c0_33 = arith.constant 0 : index
    %120 = vector.load %arg16[%c0_32, %c0_33] : memref<8x1xf32, #tpu.memory_space<vmem>>, vector<8x1xf32>
    %cst_34 = arith.constant dense<0.000000e+00> : vector<8xf32>
    %121 = vector.multi_reduction <add>, %119, %cst_34 [1] : vector<8x8xf32> to vector<8xf32>
    %122 = vector.shape_cast %121 : vector<8xf32> to vector<8x1xf32>
    %123 = arith.addf %120, %122 : vector<8x1xf32>
    %c0_35 = arith.constant 0 : index
    %c0_36 = arith.constant 0 : index
    %124 = vector.load %arg16[%c0_35, %c0_36] : memref<8x1xf32, #tpu.memory_space<vmem>>, vector<8x1xf32>
    tpu.vector_store %arg16[%c0_35, %c0_36], %123 {strides = array<i32>} : memref<8x1xf32, #tpu.memory_space<vmem>>, vector<8x1xf32>,
    %c0_37 = arith.constant 0 : index
    %c0_38 = arith.constant 0 : index
    %125 = vector.load %arg17[%c0_37, %c0_38] : memref<8x3xf32, #tpu.memory_space<vmem>>, vector<8x3xf32>
    %cst_39 = arith.constant dense<0.000000e+00> : vector<8x3xf32>
    %126 = tpu.matmul %119, %3, %cst_39 {dimension_numbers = #tpu.dot_dimension_numbers<[1], [0], [0], [1], [0, 0, 1, 1], [], []>, precision = #tpu.contract_precision<fp32>} : vector<8x8xf32>, vector<8x3xf32>, vector<8x3xf32> -> vector<8x3xf32>
    %127 = arith.addf %125, %126 : vector<8x3xf32>
    %c0_40 = arith.constant 0 : index
    %c0_41 = arith.constant 0 : index
    %128 = vector.load %arg17[%c0_40, %c0_41] : memref<8x3xf32, #tpu.memory_space<vmem>>, vector<8x3xf32>
    tpu.vector_store %arg17[%c0_40, %c0_41], %127 {strides = array<i32>} : memref<8x3xf32, #tpu.memory_space<vmem>>, vector<8x3xf32>,
    %c0_42 = arith.constant 0 : index
    %c0_43 = arith.constant 0 : index
    %129 = vector.load %arg15[%c0_42, %c0_43] : memref<8x32xf32, #tpu.memory_space<vmem>>, vector<8x32xf32>
    %cst_44 = arith.constant 0.000000e+00 : f32
    %130 = vector.broadcast %cst_44 : f32 to vector<8x32x8xf32>
    %131 = arith.maximumf %99, %130 : vector<8x32x8xf32>
    %132 = vector.shape_cast %11 : vector<1x8xf32> to vector<1x1x8xf32>
    %133 = vector.broadcast %132 : vector<1x1x8xf32> to vector<8x32x8xf32>
    %134 = arith.mulf %131, %133 : vector<8x32x8xf32>
    %cst_45 = arith.constant dense<0.000000e+00> : vector<8x32xf32>
    %135 = vector.multi_reduction <add>, %134, %cst_45 [2] : vector<8x32x8xf32> to vector<8x32xf32>
    %136 = arith.addf %129, %135 : vector<8x32xf32>
    %c0_46 = arith.constant 0 : index
    %c0_47 = arith.constant 0 : index
    %137 = vector.load %arg15[%c0_46, %c0_47] : memref<8x32xf32, #tpu.memory_space<vmem>>, vector<8x32xf32>
    tpu.vector_store %arg15[%c0_46, %c0_47], %136 {strides = array<i32>} : memref<8x32xf32, #tpu.memory_space<vmem>>, vector<8x32xf32>,
    %c0_i32_48 = arith.constant 0 : i32
    %138 = arith.cmpi eq, %arg2, %c0_i32_48 : i32
    %139 = arith.extui %138 : i1 to i32
    %c0_i32_49 = arith.constant 0 : i32
    %140 = arith.cmpi ne, %139, %c0_i32_49 : i32
    scf.if %140 {
      %c0_50 = arith.constant 0 : index
      %c0_51 = arith.constant 0 : index
      %c0_52 = arith.constant 0 : index
      %141 = vector.load %arg6[%c0_50, %c0_51, %c0_52] : memref<1x8x1xf32, #tpu.memory_space<vmem>>, vector<1x8x1xf32>
      %142 = vector.shape_cast %141 : vector<1x8x1xf32> to vector<8x1xf32>
      %c0_53 = arith.constant 0 : index
      %c0_54 = arith.constant 0 : index
      %143 = vector.load %arg15[%c0_53, %c0_54] : memref<8x32xf32, #tpu.memory_space<vmem>>, vector<8x32xf32>
      %144 = vector.broadcast %142 : vector<8x1xf32> to vector<8x32xf32>
      %145 = arith.mulf %143, %144 : vector<8x32xf32>
      %c0_55 = arith.constant 0 : index
      %c0_56 = arith.constant 0 : index
      %c0_57 = arith.constant 0 : index
      %146 = vector.load %arg13[%c0_55, %c0_56, %c0_57] : memref<1x8x32xf32, #tpu.memory_space<vmem>>, vector<1x8x32xf32>
      %147 = vector.shape_cast %146 : vector<1x8x32xf32> to vector<8x32xf32>
      %148 = vector.shape_cast %145 : vector<8x32xf32> to vector<1x8x32xf32>
      tpu.vector_store %arg13[%c0_55, %c0_56, %c0_57], %148 {strides = array<i32>} : memref<1x8x32xf32, #tpu.memory_space<vmem>>, vector<1x8x32xf32>,
      %c0_58 = arith.constant 0 : index
      %c0_59 = arith.constant 0 : index
      %149 = vector.load %arg16[%c0_58, %c0_59] : memref<8x1xf32, #tpu.memory_space<vmem>>, vector<8x1xf32>
      %150 = vector.broadcast %24 : f32 to vector<8x1xf32>
      %151 = arith.mulf %150, %149 : vector<8x1xf32>
      %152 = vector.broadcast %151 : vector<8x1xf32> to vector<8x3xf32>
      %153 = arith.mulf %152, %1 : vector<8x3xf32>
      %c0_60 = arith.constant 0 : index
      %c0_61 = arith.constant 0 : index
      %154 = vector.load %arg17[%c0_60, %c0_61] : memref<8x3xf32, #tpu.memory_space<vmem>>, vector<8x3xf32>
      %155 = vector.broadcast %25 : f32 to vector<8x3xf32>
      %156 = arith.mulf %155, %154 : vector<8x3xf32>
      %157 = arith.addf %153, %156 : vector<8x3xf32>
      %158 = vector.broadcast %142 : vector<8x1xf32> to vector<8x3xf32>
      %159 = arith.mulf %157, %158 : vector<8x3xf32>
      %c0_62 = arith.constant 0 : index
      %c0_63 = arith.constant 0 : index
      %c0_64 = arith.constant 0 : index
      %160 = vector.load %arg14[%c0_62, %c0_63, %c0_64] : memref<1x8x3xf32, #tpu.memory_space<vmem>>, vector<1x8x3xf32>
      %161 = vector.shape_cast %160 : vector<1x8x3xf32> to vector<8x3xf32>
      %162 = vector.shape_cast %159 : vector<8x3xf32> to vector<1x8x3xf32>
      tpu.vector_store %arg14[%c0_62, %c0_63, %c0_64], %162 {strides = array<i32>} : memref<1x8x3xf32, #tpu.memory_space<vmem>>, vector<1x8x3xf32>,
    } else {
    }
    return
  }
  func.func @transform_0(%arg0: i32, %arg1: i32, %arg2: i32) -> i32 {
    %c0_i32 = arith.constant 0 : i32
    %c0_i32_0 = arith.constant 0 : i32
    return %c0_i32 : i32
  }
  func.func @transform_1(%arg0: i32, %arg1: i32, %arg2: i32) -> (i32, i32, i32) {
    %c0_i32 = arith.constant 0 : i32
    %c0_i32_0 = arith.constant 0 : i32
    return %arg0, %arg1, %c0_i32 : i32, i32, i32
  }
  func.func @transform_2(%arg0: i32, %arg1: i32, %arg2: i32) -> (i32, i32, i32) {
    %c0_i32 = arith.constant 0 : i32
    %c0_i32_0 = arith.constant 0 : i32
    return %arg0, %arg1, %c0_i32 : i32, i32, i32
  }
  func.func @transform_3(%arg0: i32, %arg1: i32, %arg2: i32) -> (i32, i32, i32) {
    %c0_i32 = arith.constant 0 : i32
    %c0_i32_0 = arith.constant 0 : i32
    return %arg0, %arg1, %c0_i32 : i32, i32, i32
  }
  func.func @transform_4(%arg0: i32, %arg1: i32, %arg2: i32) -> (i32, i32, i32) {
    %c0_i32 = arith.constant 0 : i32
    %c0_i32_0 = arith.constant 0 : i32
    return %arg0, %arg2, %c0_i32 : i32, i32, i32
  }
  func.func @transform_5(%arg0: i32, %arg1: i32, %arg2: i32) -> (i32, i32, i32) {
    %c0_i32 = arith.constant 0 : i32
    %c0_i32_0 = arith.constant 0 : i32
    return %arg0, %c0_i32, %arg2 : i32, i32, i32
  }
  func.func @transform_6(%arg0: i32, %arg1: i32, %arg2: i32) -> (i32, i32, i32) {
    %c0_i32 = arith.constant 0 : i32
    %c0_i32_0 = arith.constant 0 : i32
    return %arg0, %c0_i32, %arg2 : i32, i32, i32
  }
  func.func @transform_7(%arg0: i32, %arg1: i32, %arg2: i32) -> (i32, i32, i32) {
    %c0_i32 = arith.constant 0 : i32
    %c0_i32_0 = arith.constant 0 : i32
    return %arg0, %c0_i32, %arg2 : i32, i32, i32
  }
  func.func @transform_8(%arg0: i32, %arg1: i32, %arg2: i32) -> (i32, i32) {
    %c0_i32 = arith.constant 0 : i32
    %c0_i32_0 = arith.constant 0 : i32
    %c0_i32_1 = arith.constant 0 : i32
    return %c0_i32, %c0_i32_0 : i32, i32
  }
  func.func @transform_9(%arg0: i32, %arg1: i32, %arg2: i32) -> (i32, i32) {
    %c0_i32 = arith.constant 0 : i32
    %c0_i32_0 = arith.constant 0 : i32
    %c0_i32_1 = arith.constant 0 : i32
    return %c0_i32, %c0_i32_0 : i32, i32
  }
  func.func @transform_10(%arg0: i32, %arg1: i32, %arg2: i32) -> (i32, i32, i32) {
    %c0_i32 = arith.constant 0 : i32
    %c0_i32_0 = arith.constant 0 : i32
    return %arg0, %arg1, %c0_i32 : i32, i32, i32
  }
  func.func @transform_11(%arg0: i32, %arg1: i32, %arg2: i32) -> (i32, i32, i32) {
    %c0_i32 = arith.constant 0 : i32
    %c0_i32_0 = arith.constant 0 : i32
    return %arg0, %arg1, %c0_i32 : i32, i32, i32
  }
}

</mosaic_0001>

<llo_original>
// kernel: tpu_custom_call.1
$region0: #{tpu_custom_call.1}
  #allocation0 [shape = 'u32[]', space=smem, size = 0x4, offset = 0x4, fixed_abs, tag = 'smem constant byte address 0x4 - core index']
  #allocation1 [shape = 'u32[72,128]{1,0:T(1,128)}', space=vmem, size = 0x9000, scoped, tag = 'internal scratch']
  #allocation2 [shape = 'f32[8,32]{1,0:T(8,128)}', space=vmem, size = 0x1000, scoped, tag = 'scratch operand']
  #allocation3 [shape = 'f32[8,1]{1,0:T(8,128)}', space=vmem, size = 0x1000, scoped, tag = 'scratch operand']
  #allocation4 [shape = 'f32[8,3]{1,0:T(8,128)}', space=vmem, size = 0x1000, scoped, tag = 'scratch operand']
  %s0 = inlined_call_operand.vmem [shape: f32[12], index: 0, kind: input, shape index: {}]
  %s1 = inlined_call_operand.vmem [shape: f32[2,8,3], index: 1, kind: input, shape index: {}]
  %s2 = inlined_call_operand.vmem [shape: f32[2,8,32], index: 2, kind: input, shape index: {}]
  %s3 = inlined_call_operand.vmem [shape: f32[2,8,1], index: 3, kind: input, shape index: {}]
  %s4 = inlined_call_operand.vmem [shape: f32[2,8,3], index: 4, kind: input, shape index: {}]
  %s5 = inlined_call_operand.vmem [shape: f32[2,3,8], index: 5, kind: input, shape index: {}]
  %s6 = inlined_call_operand.vmem [shape: f32[2,32,8], index: 6, kind: input, shape index: {}]
  %s7 = inlined_call_operand.vmem [shape: f32[2,1,8], index: 7, kind: input, shape index: {}]
  %s8 = inlined_call_operand.vmem [shape: f32[32,3], index: 8, kind: input, shape index: {}]
  %s9 = inlined_call_operand.vmem [shape: f32[32,1], index: 9, kind: input, shape index: {}]
  %s10 = inlined_call_operand.hbm [shape: f32[2,8,32], index: 10, kind: output, shape index: {0}]
  %s11 = inlined_call_operand.vmem [shape: f32[2,8,3], index: 11, kind: output, shape index: {1}]
  %12 = xla_tuple %s10, %s11
  %s13 = sld [smem:[#allocation0]]
  $region93: #{tpu_custom_call.1} parent=0
    _
  %s15 = ssub.s32 1, %s13
  %s16 = scalar_select 0, %s15, %s13
  $region1: #{tpu_custom_call.1} parent=0
    #allocation5 [shape = 'u8[512]{0}', space=smem, size = 0x200, scoped, tag = 'input window, operand 0, single buffered']
    #allocation6 [shape = 's32[2]{0}', space=sflag, size = 0x8, scoped, tag = 'scoped memory for tpu_custom_call.1']
    #allocation7 [shape = 's32[2]{0}', space=sflag, size = 0x8, scoped, tag = 'scoped memory for tpu_custom_call.1']
    #allocation8 [shape = 'u8[8192]{0}', space=vmem, size = 0x2000, scoped, tag = 'output window, operand 0']
    %17 = vsyncpa [#allocation7], 0
    %18 = vsyncpa [#allocation6], 0
    %s19 = scalar_lea.sflag [#allocation6], 1
    %20 = vsyncpa %s19, 0
    loop: start=0, step=1, limit=4
    $region2: #{tpu_custom_call.1} parent=1 // loop_pre_header
      _
    $region3: #{tpu_custom_call.1} parent=1 // loop_header
      %s22 = sphi 0, %s26
      %p23 = scmp.ge.s32.totalorder %s22, 4
      %s29 = sphi 0, %s48
      %s30 = sphi 0, %s44
      %s31 = sphi 0, %s40
      %s32 = sphi 0, %s29
      %s33 = sphi 0, %s30
      %s34 = sphi 0, %s31
      %s35 = sphi 0, %s32
      %s36 = sphi 0, %s33
      %s37 = sphi 0, %s34
      %s49 = sphi 0, %s49
      %s51 = sphi 0, %s49
      %s52 = sphi 0, %s51
      %s66 = sphi 0, %s52
      %s74 = sphi 0, %s76
      %s77 = sphi 0, %s74
      %s78 = sphi 0, %s77
      %s94 = sphi 0, %s78
      %s102 = sphi 0, %s104
      %s105 = sphi 0, %s102
      %s106 = sphi 0, %s105
      %s122 = sphi 0, %s106
      %s130 = sphi 0, %s132
      %s133 = sphi 0, %s130
      %s134 = sphi 0, %s133
      %s150 = sphi 0, %s134
      %s158 = sphi 0, %s160
      %s161 = sphi 0, %s158
      %s162 = sphi 0, %s161
      %s178 = sphi 0, %s162
      %s186 = sphi 0, %s188
      %s189 = sphi 0, %s186
      %s190 = sphi 0, %s189
      %s206 = sphi 0, %s190
      %s214 = sphi 0, %s216
      %s217 = sphi 0, %s214
      %s218 = sphi 0, %s217
      %s234 = sphi 0, %s218
      %s242 = sphi 0, %s244
      %s245 = sphi 0, %s242
      %s246 = sphi 0, %s245
      %s262 = sphi 0, %s246
      %s266 = sphi 0, %s266
      %s268 = sphi 0, %s266
      %s269 = sphi 0, %s268
      %s283 = sphi 0, %s269
      %s287 = sphi 0, %s287
      %s289 = sphi 0, %s287
      %s290 = sphi 0, %s289
      %s304 = sphi 0, %s290
      %s312 = sphi 0, %s314
      %s315 = sphi 0, %s312
      %s316 = sphi 0, %s315
      %s332 = sphi 0, %s316
      %s340 = sphi 0, %s342
      %s343 = sphi 0, %s340
      %s344 = sphi 0, %s343
      %s360 = sphi 0, %s344
    $region4: #{tpu_custom_call.1} parent=1 // loop_header_branch
      %25 = sbr.rel (%p23) target = $region8
    $region5: #{tpu_custom_call.1} parent=1 // loop_body
      %s27 = ssub.s32 %s22, 1
      %s28 = ssub.s32 %s22, 2
      %s38 = sadd.s32 1, %s31
      %p39 = scmp.ge.s32.totalorder %s38, 1
      %s40 = scalar_select %p39, 0, %s38
      %s41 = sadd.s32 1, %s30
      %s42 = scalar_select %p39, %s41, %s30
      %p43 = scmp.ge.s32.totalorder %s42, 1
      %s44 = scalar_select %p43, 0, %s42
      %s45 = sadd.s32 1, %s29
      %s46 = scalar_select %p43, %s45, %s29
      %p47 = scmp.ge.s32.totalorder %s46, 2
      %s48 = scalar_select %p47, 0, %s46
      %s50 = sadd.s32 %s49, 1
      %p53 = scmp.eq.s32.totalorder %s22, 1
      %p54 = scmp.ne.s32.totalorder %s49, %s51
      %p55 = scmp.eq.s32.totalorder %s22, 0
      %p56 = por %p54, %p55
      %p57 = scmp.ne.s32.totalorder %s49, %s51
      %p58 = scmp.eq.s32.totalorder %s27, 1
      %p59 = por %p57, %p58
      %p60 = scmp.ne.s32.totalorder %s51, %s52
      %p61 = scmp.eq.s32.totalorder %s27, 0
      %p62 = por %p60, %p61
      %p63 = scmp.ne.s32.totalorder %s51, %s52
      %p64 = scmp.eq.s32.totalorder %s28, 1
      %p65 = por %p63, %p64
      %p67 = scmp.ne.s32.totalorder %s52, %s66
      %p68 = scmp.eq.s32.totalorder %s28, 0
      %p69 = por %p67, %p68
      %s70 = ssub.s32 %s29, %s48
      %s71 = ssub.s32 %s30, %s44
      %s72 = sor.u32 %s70, %s71
      %p73 = scmp.eq.s32.totalorder %s72, 0
      %s75 = sadd.s32 %s74, 1
      %s76 = scalar_select %p73, %s74, %s75
      %p79 = pneg %p73
      %p80 = scmp.eq.s32.totalorder %s22, 1
      %p81 = por %p79, %p80
      %p82 = scmp.ne.s32.totalorder %s74, %s77
      %p83 = scmp.eq.s32.totalorder %s22, 0
      %p84 = por %p82, %p83
      %p85 = scmp.ne.s32.totalorder %s74, %s77
      %p86 = scmp.eq.s32.totalorder %s27, 1
      %p87 = por %p85, %p86
      %p88 = scmp.ne.s32.totalorder %s77, %s78
      %p89 = scmp.eq.s32.totalorder %s27, 0
      %p90 = por %p88, %p89
      %p91 = scmp.ne.s32.totalorder %s77, %s78
      %p92 = scmp.eq.s32.totalorder %s28, 1
      %p93 = por %p91, %p92
      %p95 = scmp.ne.s32.totalorder %s78, %s94
      %p96 = scmp.eq.s32.totalorder %s28, 0
      %p97 = por %p95, %p96
      %s98 = ssub.s32 %s29, %s48
      %s99 = ssub.s32 %s30, %s44
      %s100 = sor.u32 %s98, %s99
      %p101 = scmp.eq.s32.totalorder %s100, 0
      %s103 = sadd.s32 %s102, 1
      %s104 = scalar_select %p101, %s102, %s103
      %p107 = pneg %p101
      %p108 = scmp.eq.s32.totalorder %s22, 1
      %p109 = por %p107, %p108
      %p110 = scmp.ne.s32.totalorder %s102, %s105
      %p111 = scmp.eq.s32.totalorder %s22, 0
      %p112 = por %p110, %p111
      %p113 = scmp.ne.s32.totalorder %s102, %s105
      %p114 = scmp.eq.s32.totalorder %s27, 1
      %p115 = por %p113, %p114
      %p116 = scmp.ne.s32.totalorder %s105, %s106
      %p117 = scmp.eq.s32.totalorder %s27, 0
      %p118 = por %p116, %p117
      %p119 = scmp.ne.s32.totalorder %s105, %s106
      %p120 = scmp.eq.s32.totalorder %s28, 1
      %p121 = por %p119, %p120
      %p123 = scmp.ne.s32.totalorder %s106, %s122
      %p124 = scmp.eq.s32.totalorder %s28, 0
      %p125 = por %p123, %p124
      %s126 = ssub.s32 %s29, %s48
      %s127 = ssub.s32 %s30, %s44
      %s128 = sor.u32 %s126, %s127
      %p129 = scmp.eq.s32.totalorder %s128, 0
      %s131 = sadd.s32 %s130, 1
      %s132 = scalar_select %p129, %s130, %s131
      %p135 = pneg %p129
      %p136 = scmp.eq.s32.totalorder %s22, 1
      %p137 = por %p135, %p136
      %p138 = scmp.ne.s32.totalorder %s130, %s133
      %p139 = scmp.eq.s32.totalorder %s22, 0
      %p140 = por %p138, %p139
      %p141 = scmp.ne.s32.totalorder %s130, %s133
      %p142 = scmp.eq.s32.totalorder %s27, 1
      %p143 = por %p141, %p142
      %p144 = scmp.ne.s32.totalorder %s133, %s134
      %p145 = scmp.eq.s32.totalorder %s27, 0
      %p146 = por %p144, %p145
      %p147 = scmp.ne.s32.totalorder %s133, %s134
      %p148 = scmp.eq.s32.totalorder %s28, 1
      %p149 = por %p147, %p148
      %p151 = scmp.ne.s32.totalorder %s134, %s150
      %p152 = scmp.eq.s32.totalorder %s28, 0
      %p153 = por %p151, %p152
      %s154 = ssub.s32 %s29, %s48
      %s155 = ssub.s32 %s31, %s40
      %s156 = sor.u32 %s154, %s155
      %p157 = scmp.eq.s32.totalorder %s156, 0
      %s159 = sadd.s32 %s158, 1
      %s160 = scalar_select %p157, %s158, %s159
      %p163 = pneg %p157
      %p164 = scmp.eq.s32.totalorder %s22, 1
      %p165 = por %p163, %p164
      %p166 = scmp.ne.s32.totalorder %s158, %s161
      %p167 = scmp.eq.s32.totalorder %s22, 0
      %p168 = por %p166, %p167
      %p169 = scmp.ne.s32.totalorder %s158, %s161
      %p170 = scmp.eq.s32.totalorder %s27, 1
      %p171 = por %p169, %p170
      %p172 = scmp.ne.s32.totalorder %s161, %s162
      %p173 = scmp.eq.s32.totalorder %s27, 0
      %p174 = por %p172, %p173
      %p175 = scmp.ne.s32.totalorder %s161, %s162
      %p176 = scmp.eq.s32.totalorder %s28, 1
      %p177 = por %p175, %p176
      %p179 = scmp.ne.s32.totalorder %s162, %s178
      %p180 = scmp.eq.s32.totalorder %s28, 0
      %p181 = por %p179, %p180
      %s182 = ssub.s32 %s29, %s48
      %s183 = ssub.s32 %s31, %s40
      %s184 = sor.u32 %s182, %s183
      %p185 = scmp.eq.s32.totalorder %s184, 0
      %s187 = sadd.s32 %s186, 1
      %s188 = scalar_select %p185, %s186, %s187
      %p191 = pneg %p185
      %p192 = scmp.eq.s32.totalorder %s22, 1
      %p193 = por %p191, %p192
      %p194 = scmp.ne.s32.totalorder %s186, %s189
      %p195 = scmp.eq.s32.totalorder %s22, 0
      %p196 = por %p194, %p195
      %p197 = scmp.ne.s32.totalorder %s186, %s189
      %p198 = scmp.eq.s32.totalorder %s27, 1
      %p199 = por %p197, %p198
      %p200 = scmp.ne.s32.totalorder %s189, %s190
      %p201 = scmp.eq.s32.totalorder %s27, 0
      %p202 = por %p200, %p201
      %p203 = scmp.ne.s32.totalorder %s189, %s190
      %p204 = scmp.eq.s32.totalorder %s28, 1
      %p205 = por %p203, %p204
      %p207 = scmp.ne.s32.totalorder %s190, %s206
      %p208 = scmp.eq.s32.totalorder %s28, 0
      %p209 = por %p207, %p208
      %s210 = ssub.s32 %s29, %s48
      %s211 = ssub.s32 %s31, %s40
      %s212 = sor.u32 %s210, %s211
      %p213 = scmp.eq.s32.totalorder %s212, 0
      %s215 = sadd.s32 %s214, 1
      %s216 = scalar_select %p213, %s214, %s215
      %p219 = pneg %p213
      %p220 = scmp.eq.s32.totalorder %s22, 1
      %p221 = por %p219, %p220
      %p222 = scmp.ne.s32.totalorder %s214, %s217
      %p223 = scmp.eq.s32.totalorder %s22, 0
      %p224 = por %p222, %p223
      %p225 = scmp.ne.s32.totalorder %s214, %s217
      %p226 = scmp.eq.s32.totalorder %s27, 1
      %p227 = por %p225, %p226
      %p228 = scmp.ne.s32.totalorder %s217, %s218
      %p229 = scmp.eq.s32.totalorder %s27, 0
      %p230 = por %p228, %p229
      %p231 = scmp.ne.s32.totalorder %s217, %s218
      %p232 = scmp.eq.s32.totalorder %s28, 1
      %p233 = por %p231, %p232
      %p235 = scmp.ne.s32.totalorder %s218, %s234
      %p236 = scmp.eq.s32.totalorder %s28, 0
      %p237 = por %p235, %p236
      %s238 = ssub.s32 %s29, %s48
      %s239 = ssub.s32 %s31, %s40
      %s240 = sor.u32 %s238, %s239
      %p241 = scmp.eq.s32.totalorder %s240, 0
      %s243 = sadd.s32 %s242, 1
      %s244 = scalar_select %p241, %s242, %s243
      %p247 = pneg %p241
      %p248 = scmp.eq.s32.totalorder %s22, 1
      %p249 = por %p247, %p248
      %p250 = scmp.ne.s32.totalorder %s242, %s245
      %p251 = scmp.eq.s32.totalorder %s22, 0
      %p252 = por %p250, %p251
      %p253 = scmp.ne.s32.totalorder %s242, %s245
      %p254 = scmp.eq.s32.totalorder %s27, 1
      %p255 = por %p253, %p254
      %p256 = scmp.ne.s32.totalorder %s245, %s246
      %p257 = scmp.eq.s32.totalorder %s27, 0
      %p258 = por %p256, %p257
      %p259 = scmp.ne.s32.totalorder %s245, %s246
      %p260 = scmp.eq.s32.totalorder %s28, 1
      %p261 = por %p259, %p260
      %p263 = scmp.ne.s32.totalorder %s246, %s262
      %p264 = scmp.eq.s32.totalorder %s28, 0
      %p265 = por %p263, %p264
      %s267 = sadd.s32 %s266, 1
      %p270 = scmp.eq.s32.totalorder %s22, 1
      %p271 = scmp.ne.s32.totalorder %s266, %s268
      %p272 = scmp.eq.s32.totalorder %s22, 0
      %p273 = por %p271, %p272
      %p274 = scmp.ne.s32.totalorder %s266, %s268
      %p275 = scmp.eq.s32.totalorder %s27, 1
      %p276 = por %p274, %p275
      %p277 = scmp.ne.s32.totalorder %s268, %s269
      %p278 = scmp.eq.s32.totalorder %s27, 0
      %p279 = por %p277, %p278
      %p280 = scmp.ne.s32.totalorder %s268, %s269
      %p281 = scmp.eq.s32.totalorder %s28, 1
      %p282 = por %p280, %p281
      %p284 = scmp.ne.s32.totalorder %s269, %s283
      %p285 = scmp.eq.s32.totalorder %s28, 0
      %p286 = por %p284, %p285
      %s288 = sadd.s32 %s287, 1
      %p291 = scmp.eq.s32.totalorder %s22, 1
      %p292 = scmp.ne.s32.totalorder %s287, %s289
      %p293 = scmp.eq.s32.totalorder %s22, 0
      %p294 = por %p292, %p293
      %p295 = scmp.ne.s32.totalorder %s287, %s289
      %p296 = scmp.eq.s32.totalorder %s27, 1
      %p297 = por %p295, %p296
      %p298 = scmp.ne.s32.totalorder %s289, %s290
      %p299 = scmp.eq.s32.totalorder %s27, 0
      %p300 = por %p298, %p299
      %p301 = scmp.ne.s32.totalorder %s289, %s290
      %p302 = scmp.eq.s32.totalorder %s28, 1
      %p303 = por %p301, %p302
      %p305 = scmp.ne.s32.totalorder %s290, %s304
      %p306 = scmp.eq.s32.totalorder %s28, 0
      %p307 = por %p305, %p306
      %s308 = ssub.s32 %s29, %s48
      %s309 = ssub.s32 %s30, %s44
      %s310 = sor.u32 %s308, %s309
      %p311 = scmp.eq.s32.totalorder %s310, 0
      %s313 = sadd.s32 %s312, 1
      %s314 = scalar_select %p311, %s312, %s313
      %p317 = pneg %p311
      %p318 = scmp.eq.s32.totalorder %s22, 1
      %p319 = por %p317, %p318
      %p320 = scmp.ne.s32.totalorder %s312, %s315
      %p321 = scmp.eq.s32.totalorder %s22, 0
      %p322 = por %p320, %p321
      %p323 = scmp.ne.s32.totalorder %s312, %s315
      %p324 = scmp.eq.s32.totalorder %s27, 1
      %p325 = por %p323, %p324
      %p326 = scmp.ne.s32.totalorder %s315, %s316
      %p327 = scmp.eq.s32.totalorder %s27, 0
      %p328 = por %p326, %p327
      %p329 = scmp.ne.s32.totalorder %s315, %s316
      %p330 = scmp.eq.s32.totalorder %s28, 1
      %p331 = por %p329, %p330
      %p333 = scmp.ne.s32.totalorder %s316, %s332
      %p334 = scmp.eq.s32.totalorder %s28, 0
      %p335 = por %p333, %p334
      %s336 = ssub.s32 %s29, %s48
      %s337 = ssub.s32 %s30, %s44
      %s338 = sor.u32 %s336, %s337
      %p339 = scmp.eq.s32.totalorder %s338, 0
      %s341 = sadd.s32 %s340, 1
      %s342 = scalar_select %p339, %s340, %s341
      %p345 = pneg %p339
      %p346 = scmp.eq.s32.totalorder %s22, 1
      %p347 = por %p345, %p346
      %p348 = scmp.ne.s32.totalorder %s340, %s343
      %p349 = scmp.eq.s32.totalorder %s22, 0
      %p350 = por %p348, %p349
      %p351 = scmp.ne.s32.totalorder %s340, %s343
      %p352 = scmp.eq.s32.totalorder %s27, 1
      %p353 = por %p351, %p352
      %p354 = scmp.ne.s32.totalorder %s343, %s344
      %p355 = scmp.eq.s32.totalorder %s27, 0
      %p356 = por %p354, %p355
      %p357 = scmp.ne.s32.totalorder %s343, %s344
      %p358 = scmp.eq.s32.totalorder %s28, 1
      %p359 = por %p357, %p358
      %p361 = scmp.ne.s32.totalorder %s344, %s360
      %p362 = scmp.eq.s32.totalorder %s28, 0
      %p363 = por %p361, %p362
      %p364 = scmp.le.s32.totalorder 1, %s22
      %p365 = scmp.lt.s32.totalorder %s22, 3
      %p366 = pnand %p364, %p365
      %p367 = pneg %p366
      // Predicated region
      $region9: #{tpu_custom_call.1} parent=5 // pred_check
        _
      $region10: #{tpu_custom_call.1} parent=5 // pred_check_branch
        %369 = sbr.rel (%p366) target = $region12
      $region11: #{tpu_custom_call.1} parent=5 // pred_region
        %s370 = ssub.s32 %s22, 1
        // Predicated region
        $region13: #{tpu_custom_call.1} parent=11 // pred_check
          %p371 = pneg %p62
        $region14: #{tpu_custom_call.1} parent=11 // pred_check_branch
          %373 = sbr.rel (%p371) target = $region16
        $region15: #{tpu_custom_call.1} parent=11 // pred_region
          %375 = vsyncadd [#allocation7], 0
          %s377 = sshll.u32 %s0, 4
          %s378 = int_to_ptr.vmem [resolvable:$true] %s377
          %380 = dma.vmem_to_smem %s378, 16, [#allocation5], [#allocation7]
        $region16: #{tpu_custom_call.1} parent=11 // pred_fallthru
          _
        // Predicated region
        $region17: #{tpu_custom_call.1} parent=11 // pred_check
          %p381 = pneg %p279
        $region18: #{tpu_custom_call.1} parent=11 // pred_check_branch
          %383 = sbr.rel (%p381) target = $region20
        $region19: #{tpu_custom_call.1} parent=11 // pred_region
          _
        $region20: #{tpu_custom_call.1} parent=11 // pred_fallthru
          _
        // Predicated region
        $region21: #{tpu_custom_call.1} parent=11 // pred_check
          %p384 = pneg %p300
        $region22: #{tpu_custom_call.1} parent=11 // pred_check_branch
          %386 = sbr.rel (%p384) target = $region24
        $region23: #{tpu_custom_call.1} parent=11 // pred_region
          _
        $region24: #{tpu_custom_call.1} parent=11 // pred_fallthru
          _
      $region12: #{tpu_custom_call.1} parent=5 // pred_fallthru
        _
      %p387 = scmp.lt.s32.totalorder %s22, 2
      // Predicated region
      $region25: #{tpu_custom_call.1} parent=5 // pred_check
        %p388 = pneg %p387
      $region26: #{tpu_custom_call.1} parent=5 // pred_check_branch
        %390 = sbr.rel (%p388) target = $region28
      $region27: #{tpu_custom_call.1} parent=5 // pred_region
        // Predicated region
        $region29: #{tpu_custom_call.1} parent=27 // pred_check
          %p391 = pneg %p84
        $region30: #{tpu_custom_call.1} parent=27 // pred_check_branch
          %393 = sbr.rel (%p391) target = $region32
        $region31: #{tpu_custom_call.1} parent=27 // pred_region
          %p394 = scmp.lt.s32.totalorder %s29, 1
          %s395 = scalar_select %p394, %s29, 1
          %p396 = scmp.lt.s32.totalorder %s30, 0
          %s397 = scalar_select %p396, %s30, 0
          %s398 = sadd.s32 %s397, %s395
          %s399 = smul.addr %s398, 8
          %s400 = scalar_lea.vmem %s1, %s399
        $region32: #{tpu_custom_call.1} parent=27 // pred_fallthru
          _
        // Predicated region
        $region33: #{tpu_custom_call.1} parent=27 // pred_check
          %p401 = pneg %p112
        $region34: #{tpu_custom_call.1} parent=27 // pred_check_branch
          %403 = sbr.rel (%p401) target = $region36
        $region35: #{tpu_custom_call.1} parent=27 // pred_region
          %p404 = scmp.lt.s32.totalorder %s29, 1
          %s405 = scalar_select %p404, %s29, 1
          %p406 = scmp.lt.s32.totalorder %s30, 0
          %s407 = scalar_select %p406, %s30, 0
          %s408 = sadd.s32 %s407, %s405
          %s409 = smul.addr %s408, 8
          %s410 = scalar_lea.vmem %s2, %s409
        $region36: #{tpu_custom_call.1} parent=27 // pred_fallthru
          _
        // Predicated region
        $region37: #{tpu_custom_call.1} parent=27 // pred_check
          %p411 = pneg %p140
        $region38: #{tpu_custom_call.1} parent=27 // pred_check_branch
          %413 = sbr.rel (%p411) target = $region40
        $region39: #{tpu_custom_call.1} parent=27 // pred_region
          %p414 = scmp.lt.s32.totalorder %s29, 1
          %s415 = scalar_select %p414, %s29, 1
          %p416 = scmp.lt.s32.totalorder %s30, 0
          %s417 = scalar_select %p416, %s30, 0
          %s418 = sadd.s32 %s417, %s415
          %s419 = smul.addr %s418, 8
          %s420 = scalar_lea.vmem %s3, %s419
        $region40: #{tpu_custom_call.1} parent=27 // pred_fallthru
          _
        // Predicated region
        $region41: #{tpu_custom_call.1} parent=27 // pred_check
          %p421 = pneg %p168
        $region42: #{tpu_custom_call.1} parent=27 // pred_check_branch
          %423 = sbr.rel (%p421) target = $region44
        $region43: #{tpu_custom_call.1} parent=27 // pred_region
          %p424 = scmp.lt.s32.totalorder %s29, 1
          %s425 = scalar_select %p424, %s29, 1
          %p426 = scmp.lt.s32.totalorder %s31, 0
          %s427 = scalar_select %p426, %s31, 0
          %s428 = sadd.s32 %s427, %s425
          %s429 = smul.addr %s428, 8
          %s430 = scalar_lea.vmem %s4, %s429
        $region44: #{tpu_custom_call.1} parent=27 // pred_fallthru
          _
        // Predicated region
        $region45: #{tpu_custom_call.1} parent=27 // pred_check
          %p431 = pneg %p196
        $region46: #{tpu_custom_call.1} parent=27 // pred_check_branch
          %433 = sbr.rel (%p431) target = $region48
        $region47: #{tpu_custom_call.1} parent=27 // pred_region
          %p434 = scmp.lt.s32.totalorder %s29, 1
          %s435 = scalar_select %p434, %s29, 1
          %p436 = scmp.lt.s32.totalorder %s31, 0
          %s437 = scalar_select %p436, %s31, 0
          %s438 = sadd.s32 %s437, %s435
          %s439 = smul.addr %s438, 4
          %s440 = scalar_lea.vmem %s5, %s439
        $region48: #{tpu_custom_call.1} parent=27 // pred_fallthru
          _
        // Predicated region
        $region49: #{tpu_custom_call.1} parent=27 // pred_check
          %p441 = pneg %p224
        $region50: #{tpu_custom_call.1} parent=27 // pred_check_branch
          %443 = sbr.rel (%p441) target = $region52
        $region51: #{tpu_custom_call.1} parent=27 // pred_region
          %p444 = scmp.lt.s32.totalorder %s29, 1
          %s445 = scalar_select %p444, %s29, 1
          %p446 = scmp.lt.s32.totalorder %s31, 0
          %s447 = scalar_select %p446, %s31, 0
          %s448 = smul.addr %s445, 4
          %s449 = sadd.s32 %s447, %s448
          %s450 = smul.addr %s449, 8
          %s451 = scalar_lea.vmem %s6, %s450
        $region52: #{tpu_custom_call.1} parent=27 // pred_fallthru
          _
        // Predicated region
        $region53: #{tpu_custom_call.1} parent=27 // pred_check
          %p452 = pneg %p252
        $region54: #{tpu_custom_call.1} parent=27 // pred_check_branch
          %454 = sbr.rel (%p452) target = $region56
        $region55: #{tpu_custom_call.1} parent=27 // pred_region
          %p455 = scmp.lt.s32.totalorder %s29, 1
          %s456 = scalar_select %p455, %s29, 1
          %p457 = scmp.lt.s32.totalorder %s31, 0
          %s458 = scalar_select %p457, %s31, 0
          %s459 = sadd.s32 %s458, %s456
          %s460 = scalar_lea.vmem %s7, %s459
        $region56: #{tpu_custom_call.1} parent=27 // pred_fallthru
          _
      $region28: #{tpu_custom_call.1} parent=5 // pred_fallthru
        _
      %p461 = scmp.le.s32.totalorder 1, %s22
      %p462 = scmp.lt.s32.totalorder %s22, 3
      %p463 = pnand %p461, %p462
      %p464 = pneg %p463
      // Predicated region
      $region57: #{tpu_custom_call.1} parent=5 // pred_check
        _
      $region58: #{tpu_custom_call.1} parent=5 // pred_check_branch
        %466 = sbr.rel (%p463) target = $region60
      $region59: #{tpu_custom_call.1} parent=5 // pred_region
        %s467 = ssub.s32 %s22, 1
        // Predicated region
        $region61: #{tpu_custom_call.1} parent=59 // pred_check
          %p468 = pneg %p62
        $region62: #{tpu_custom_call.1} parent=59 // pred_check_branch
          %470 = sbr.rel (%p468) target = $region64
        $region63: #{tpu_custom_call.1} parent=59 // pred_region
          %472 = dma.done [#allocation7], 16
        $region64: #{tpu_custom_call.1} parent=59 // pred_fallthru
          _
        %473 = sfence
        %p474 = pneg %p62
        %p475 = pneg %p59
        %p476 = scmp.lt.s32.totalorder %s32, 1
        %s477 = scalar_select %p476, %s32, 1
        %p478 = scmp.lt.s32.totalorder %s33, 0
        %s479 = scalar_select %p478, %s33, 0
        %s480 = sadd.s32 %s479, %s477
        %s481 = smul.addr %s480, 8
        %s482 = scalar_lea.vmem %s1, %s481
        %p483 = pneg %p90
        %p484 = pneg %p87
        %p485 = scmp.lt.s32.totalorder %s32, 1
        %s486 = scalar_select %p485, %s32, 1
        %p487 = scmp.lt.s32.totalorder %s33, 0
        %s488 = scalar_select %p487, %s33, 0
        %s489 = sadd.s32 %s488, %s486
        %s490 = smul.addr %s489, 8
        %s491 = scalar_lea.vmem %s2, %s490
        %p492 = pneg %p118
        %p493 = pneg %p115
        %p494 = scmp.lt.s32.totalorder %s32, 1
        %s495 = scalar_select %p494, %s32, 1
        %p496 = scmp.lt.s32.totalorder %s33, 0
        %s497 = scalar_select %p496, %s33, 0
        %s498 = sadd.s32 %s497, %s495
        %s499 = smul.addr %s498, 8
        %s500 = scalar_lea.vmem %s3, %s499
        %p501 = pneg %p146
        %p502 = pneg %p143
        %p503 = scmp.lt.s32.totalorder %s32, 1
        %s504 = scalar_select %p503, %s32, 1
        %p505 = scmp.lt.s32.totalorder %s34, 0
        %s506 = scalar_select %p505, %s34, 0
        %s507 = sadd.s32 %s506, %s504
        %s508 = smul.addr %s507, 8
        %s509 = scalar_lea.vmem %s4, %s508
        %p510 = pneg %p174
        %p511 = pneg %p171
        %p512 = scmp.lt.s32.totalorder %s32, 1
        %s513 = scalar_select %p512, %s32, 1
        %p514 = scmp.lt.s32.totalorder %s34, 0
        %s515 = scalar_select %p514, %s34, 0
        %s516 = sadd.s32 %s515, %s513
        %s517 = smul.addr %s516, 4
        %s518 = scalar_lea.vmem %s5, %s517
        %p519 = pneg %p202
        %p520 = pneg %p199
        %p521 = scmp.lt.s32.totalorder %s32, 1
        %s522 = scalar_select %p521, %s32, 1
        %p523 = scmp.lt.s32.totalorder %s34, 0
        %s524 = scalar_select %p523, %s34, 0
        %s525 = smul.addr %s522, 4
        %s526 = sadd.s32 %s524, %s525
        %s527 = smul.addr %s526, 8
        %s528 = scalar_lea.vmem %s6, %s527
        %p529 = pneg %p230
        %p530 = pneg %p227
        %p531 = scmp.lt.s32.totalorder %s32, 1
        %s532 = scalar_select %p531, %s32, 1
        %p533 = scmp.lt.s32.totalorder %s34, 0
        %s534 = scalar_select %p533, %s34, 0
        %s535 = sadd.s32 %s534, %s532
        %s536 = scalar_lea.vmem %s7, %s535
        %p537 = pneg %p258
        %p538 = pneg %p255
        %p539 = pneg %p279
        %p540 = pneg %p276
        %p541 = pneg %p300
        %p542 = pneg %p297
        %p543 = pneg %p328
        %p544 = pneg %p325
        %s545 = sand.u32 %s315, 1
        %s546 = scalar_lea.sflag [#allocation6], %s545
        %s547 = sand.u32 %s315, 1
        %s548 = smul.addr %s547, 8
        %s549 = scalar_lea.vmem [#allocation8], %s548
        %p550 = pneg %p356
        %p551 = pneg %p353
        %p552 = scmp.lt.s32.totalorder %s32, 1
        %s553 = scalar_select %p552, %s32, 1
        %p554 = scmp.lt.s32.totalorder %s33, 0
        %s555 = scalar_select %p554, %s33, 0
        %s556 = sadd.s32 %s555, %s553
        %s557 = smul.addr %s556, 8
        %s558 = scalar_lea.vmem %s11, %s557
        %p559 = scmp.lt.s32.totalorder %s32, 1
        %s560 = scalar_select %p559, %s32, 1
        %p561 = scmp.lt.s32.totalorder %s33, 0
        %s562 = scalar_select %p561, %s33, 0
        %s563 = sadd.s32 %s562, %s560
        %s564 = smul.addr %s563, 8
        %s565 = scalar_lea.vmem %s1, %s564
        %p566 = scmp.lt.s32.totalorder %s32, 1
        %s567 = scalar_select %p566, %s32, 1
        %p568 = scmp.lt.s32.totalorder %s33, 0
        %s569 = scalar_select %p568, %s33, 0
        %s570 = sadd.s32 %s569, %s567
        %s571 = smul.addr %s570, 8
        %s572 = scalar_lea.vmem %s2, %s571
        %p573 = scmp.lt.s32.totalorder %s32, 1
        %s574 = scalar_select %p573, %s32, 1
        %p575 = scmp.lt.s32.totalorder %s33, 0
        %s576 = scalar_select %p575, %s33, 0
        %s577 = sadd.s32 %s576, %s574
        %s578 = smul.addr %s577, 8
        %s579 = scalar_lea.vmem %s3, %s578
        %p580 = scmp.lt.s32.totalorder %s32, 1
        %s581 = scalar_select %p580, %s32, 1
        %p582 = scmp.lt.s32.totalorder %s34, 0
        %s583 = scalar_select %p582, %s34, 0
        %s584 = sadd.s32 %s583, %s581
        %s585 = smul.addr %s584, 8
        %s586 = scalar_lea.vmem %s4, %s585
        %p587 = scmp.lt.s32.totalorder %s32, 1
        %s588 = scalar_select %p587, %s32, 1
        %p589 = scmp.lt.s32.totalorder %s34, 0
        %s590 = scalar_select %p589, %s34, 0
        %s591 = sadd.s32 %s590, %s588
        %s592 = smul.addr %s591, 4
        %s593 = scalar_lea.vmem %s5, %s592
        %p594 = scmp.lt.s32.totalorder %s32, 1
        %s595 = scalar_select %p594, %s32, 1
        %p596 = scmp.lt.s32.totalorder %s34, 0
        %s597 = scalar_select %p596, %s34, 0
        %s598 = smul.addr %s595, 4
        %s599 = sadd.s32 %s597, %s598
        %s600 = smul.addr %s599, 8
        %s601 = scalar_lea.vmem %s6, %s600
        %p602 = scmp.lt.s32.totalorder %s32, 1
        %s603 = scalar_select %p602, %s32, 1
        %p604 = scmp.lt.s32.totalorder %s34, 0
        %s605 = scalar_select %p604, %s34, 0
        %s606 = sadd.s32 %s605, %s603
        %s607 = scalar_lea.vmem %s7, %s606
        %p608 = scmp.lt.s32.totalorder %s32, 1
        %s609 = scalar_select %p608, %s32, 1
        %p610 = scmp.lt.s32.totalorder %s33, 0
        %s611 = scalar_select %p610, %s33, 0
        %s612 = sadd.s32 %s611, %s609
        %s613 = smul.addr %s612, 8
        %s614 = scalar_lea.vmem %s11, %s613
        %v615 = vld [vmem:[%s565] sm:$0xff]
        %v616 = vld [vmem:[%s586] sm:$0xff]
        %v617 = vld [vmem:[%s593] sm:$0x7]
        %v618 = vld [vmem:[%s572] sm:$0xff]
        %v619 = vld [vmem:[%s601] sm:$0xff]
        %v620 = vld [vmem:[%s601 + $0x8] sm:$0xff]
        %v621 = vld [vmem:[%s601 + $0x10] sm:$0xff]
        %v622 = vld [vmem:[%s601 + $0x18] sm:$0xff]
        %v623 = vld [vmem:[%s607] sm:$0x1]
        %p624 = scmp.eq.s32.totalorder %s34, 0
        // Predicated region
        $region65: #{tpu_custom_call.1} parent=59 // pred_check
          %p625 = pneg %p624
        $region66: #{tpu_custom_call.1} parent=59 // pred_check_branch
          %627 = sbr.rel (%p625) target = $region68
        $region67: #{tpu_custom_call.1} parent=59 // pred_region
          %vm628 = vcmask 261120
          %629 = vst.msk [vmem:[#allocation2] sm:$0xff] %vm628, 0.0
          %vm630 = vcmask 7168
          %631 = vst.msk [vmem:[#allocation3] sm:$0xff] %vm630, 0.0
          %vm632 = vcmask 23552
          %633 = vst.msk [vmem:[#allocation4] sm:$0xff] %vm632, 0.0
        $region68: #{tpu_custom_call.1} parent=59 // pred_fallthru
          _
        %s634 = sld [smem:[#allocation5]]
        %s635 = sld [smem:[#allocation5 + $0x1]]
        %s636 = sld [smem:[#allocation5 + $0x2]]
        %s637 = sld [smem:[#allocation5 + $0x3]]
        %s638 = sld [smem:[#allocation5 + $0x4]]
        %s639 = sld [smem:[#allocation5 + $0x5]]
        %s640 = sld [smem:[#allocation5 + $0x6]]
        %s641 = sld [smem:[#allocation5 + $0x7]]
        %s642 = sld [smem:[#allocation5 + $0x8]]
        %s643 = sld [smem:[#allocation5 + $0x9]]
        %s644 = sld [smem:[#allocation5 + $0xa]]
        %s645 = sld [smem:[#allocation5 + $0xb]]
        %v646 = vmul.f32 %v615, %v615
        %vm647 = vcmask 23552
        %v648 = vsel %vm647, %v646, 0.0
        %649 = vadd.xlane.f32.xlu0 %v648
        %v650 = vpop.xlane.xlu0 %649
        %v651 = vmul.f32 %v617, %v617
        %vm652 = vcmask 59392
        %v653 = vsel %vm652, %v651, 0.0
        %v654 = vrot.slane %v653, 4
        %v655 = vadd.f32 %v653, %v654
        %v656 = vrot.slane %v655, 2
        %v657 = vadd.f32 %v655, %v656
        %v658 = vrot.slane %v657, 1
        %v659 = vadd.f32 %v657, %v658
        %v661 = vsel %vm647, %v615, 0
        %vm663 = vcmask 1042432
        %v665 = vsel %vm663, %v617, 0
        %667 = vmatpush.msra.mxu0 0.0
        %668 = vmatpush.msra.mxu0 0.0
        %669 = vmatpush.msra.mxu0 0.0
        %670 = vmatpush.msra.mxu0 0.0
        %671 = vmatpush.msra.mxu0 0.0
        %672 = vmatpush.msra.mxu0 0.0
        %673 = vmatpush.msra.mxu0 0.0
        %674 = vmatpush.msra.mxu0 0.0
        %675 = vmatpush.msra.mxu0 0.0
        %676 = vmatpush.msra.mxu0 0.0
        %677 = vmatpush.msra.mxu0 0.0
        %678 = vmatpush.msra.mxu0 0.0
        %679 = vmatpush.msra.mxu0 0.0
        %680 = vmatpush.msra.mxu0 0.0
        %681 = vmatpush.msra.mxu0 0.0
        %v682 = vand.u32 %v665, 4294901760
        %683 = vmatpush.msra.mxu0 %v682
        %v684 = vand.u32 %v661, 4294901760
        %v685 = vsub.f32 %v661, %v684
        %v686 = vand.u32 %v685, 4294901760
        %v687 = vsub.f32 %v685, %v686
        %v688 = vand.u32 %v687, 4294901760
        %689 = vmatmul.f32.gmra.mxu0 %v688
        %v690 = vpop.f32.mrf.mxu0
        %v691 = vadd.f32 0.0, %v690
        %692 = vdwg.mxu0
        %693 = vmatpush.msra.mxu0 0.0
        %694 = vmatpush.msra.mxu0 0.0
        %695 = vmatpush.msra.mxu0 0.0
        %696 = vmatpush.msra.mxu0 0.0
        %697 = vmatpush.msra.mxu0 0.0
        %698 = vmatpush.msra.mxu0 0.0
        %699 = vmatpush.msra.mxu0 0.0
        %700 = vmatpush.msra.mxu0 0.0
        %701 = vmatpush.msra.mxu0 0.0
        %702 = vmatpush.msra.mxu0 0.0
        %703 = vmatpush.msra.mxu0 0.0
        %704 = vmatpush.msra.mxu0 0.0
        %705 = vmatpush.msra.mxu0 0.0
        %706 = vmatpush.msra.mxu0 0.0
        %707 = vmatpush.msra.mxu0 0.0
        %v708 = vand.u32 %v665, 4294901760
        %v709 = vsub.f32 %v665, %v708
        %v710 = vand.u32 %v709, 4294901760
        %v711 = vsub.f32 %v709, %v710
        %v712 = vand.u32 %v711, 4294901760
        %713 = vmatpush.msra.mxu0 %v712
        %v714 = vand.u32 %v661, 4294901760
        %715 = vmatmul.f32.gmra.mxu0 %v714
        %v716 = vpop.f32.mrf.mxu0
        %v717 = vadd.f32 %v691, %v716
        %718 = vdwg.mxu0
        %719 = vmatpush.msra.mxu0 0.0
        %720 = vmatpush.msra.mxu0 0.0
        %721 = vmatpush.msra.mxu0 0.0
        %722 = vmatpush.msra.mxu0 0.0
        %723 = vmatpush.msra.mxu0 0.0
        %724 = vmatpush.msra.mxu0 0.0
        %725 = vmatpush.msra.mxu0 0.0
        %726 = vmatpush.msra.mxu0 0.0
        %727 = vmatpush.msra.mxu0 0.0
        %728 = vmatpush.msra.mxu0 0.0
        %729 = vmatpush.msra.mxu0 0.0
        %730 = vmatpush.msra.mxu0 0.0
        %731 = vmatpush.msra.mxu0 0.0
        %732 = vmatpush.msra.mxu0 0.0
        %733 = vmatpush.msra.mxu0 0.0
        %v734 = vand.u32 %v665, 4294901760
        %v735 = vsub.f32 %v665, %v734
        %736 = vmatpush.msra.mxu0 %v735
        %v737 = vand.u32 %v661, 4294901760
        %v738 = vsub.f32 %v661, %v737
        %739 = vmatmul.f32.gmra.mxu0 %v738
        %v740 = vpop.f32.mrf.mxu0
        %v741 = vadd.f32 %v717, %v740
        %742 = vdwg.mxu0
        %743 = vmatpush.msra.mxu0 0.0
        %744 = vmatpush.msra.mxu0 0.0
        %745 = vmatpush.msra.mxu0 0.0
        %746 = vmatpush.msra.mxu0 0.0
        %747 = vmatpush.msra.mxu0 0.0
        %748 = vmatpush.msra.mxu0 0.0
        %749 = vmatpush.msra.mxu0 0.0
        %750 = vmatpush.msra.mxu0 0.0
        %751 = vmatpush.msra.mxu0 0.0
        %752 = vmatpush.msra.mxu0 0.0
        %753 = vmatpush.msra.mxu0 0.0
        %754 = vmatpush.msra.mxu0 0.0
        %755 = vmatpush.msra.mxu0 0.0
        %756 = vmatpush.msra.mxu0 0.0
        %757 = vmatpush.msra.mxu0 0.0
        %v758 = vand.u32 %v665, 4294901760
        %759 = vmatpush.msra.mxu0 %v758
        %v760 = vand.u32 %v661, 4294901760
        %v761 = vsub.f32 %v661, %v760
        %v762 = vand.u32 %v761, 4294901760
        %763 = vmatmul.f32.gmra.mxu0 %v762
        %v764 = vpop.f32.mrf.mxu0
        %v765 = vadd.f32 %v741, %v764
        %766 = vdwg.mxu0
        %767 = vmatpush.msra.mxu0 0.0
        %768 = vmatpush.msra.mxu0 0.0
        %769 = vmatpush.msra.mxu0 0.0
        %770 = vmatpush.msra.mxu0 0.0
        %771 = vmatpush.msra.mxu0 0.0
        %772 = vmatpush.msra.mxu0 0.0
        %773 = vmatpush.msra.mxu0 0.0
        %774 = vmatpush.msra.mxu0 0.0
        %775 = vmatpush.msra.mxu0 0.0
        %776 = vmatpush.msra.mxu0 0.0
        %777 = vmatpush.msra.mxu0 0.0
        %778 = vmatpush.msra.mxu0 0.0
        %779 = vmatpush.msra.mxu0 0.0
        %780 = vmatpush.msra.mxu0 0.0
        %781 = vmatpush.msra.mxu0 0.0
        %v782 = vand.u32 %v665, 4294901760
        %v783 = vsub.f32 %v665, %v782
        %v784 = vand.u32 %v783, 4294901760
        %785 = vmatpush.msra.mxu0 %v784
        %v786 = vand.u32 %v661, 4294901760
        %787 = vmatmul.f32.gmra.mxu0 %v786
        %v788 = vpop.f32.mrf.mxu0
        %v789 = vadd.f32 %v765, %v788
        %790 = vdwg.mxu0
        %791 = vmatpush.msra.mxu0 0.0
        %792 = vmatpush.msra.mxu0 0.0
        %793 = vmatpush.msra.mxu0 0.0
        %794 = vmatpush.msra.mxu0 0.0
        %795 = vmatpush.msra.mxu0 0.0
        %796 = vmatpush.msra.mxu0 0.0
        %797 = vmatpush.msra.mxu0 0.0
        %798 = vmatpush.msra.mxu0 0.0
        %799 = vmatpush.msra.mxu0 0.0
        %800 = vmatpush.msra.mxu0 0.0
        %801 = vmatpush.msra.mxu0 0.0
        %802 = vmatpush.msra.mxu0 0.0
        %803 = vmatpush.msra.mxu0 0.0
        %804 = vmatpush.msra.mxu0 0.0
        %805 = vmatpush.msra.mxu0 0.0
        %v806 = vand.u32 %v665, 4294901760
        %807 = vmatpush.msra.mxu0 %v806
        %v808 = vand.u32 %v661, 4294901760
        %809 = vmatmul.f32.gmra.mxu0 %v808
        %v810 = vpop.f32.mrf.mxu0
        %v811 = vadd.f32 %v789, %v810
        %812 = vdwg.mxu0
        %v813 = vstv %s634
        %v814 = vmul.f32 %v813, %v650
        %v815 = vstv %s637
        %v816 = vmul.f32 %v815, %v811
        %v817 = vadd.f32 %v814, %v816
        %v818 = vstv %s640
        %v819 = vmul.f32 %v818, %v659
        %v820 = vadd.f32 %v817, %v819
        %v821 = vmax.f32 %v820, 1e-08
        %v822 = vrsqrt.pop %v821
        %v823 = vmul.f32 %v822, %v821
        %v824 = vmul.f32 %v823, %v822
        %v825 = vmul.f32 0.5, %v824
        %v826 = vsub.f32 1.5, %v825
        %v827 = vmul.f32 %v822, %v826
        %v828 = vmul.f32 %v821, %v827
        %vm829 = vcmp.eq.f32.partialorder %v821, inf
        %v830 = vsel %vm829, %v821, %v828
        %vm831 = vcmp.eq.f32.partialorder %v821, 0.0
        %v832 = vand.u32 %v821, 2147483648
        %v833 = vsel %vm831, %v832, %v830
        %v834 = vstv %s635
        %v835 = vmul.f32 %v834, %v650
        %v836 = vstv %s638
        %v837 = vmul.f32 %v836, %v811
        %v838 = vadd.f32 %v835, %v837
        %v839 = vstv %s641
        %v840 = vmul.f32 %v839, %v659
        %v841 = vadd.f32 %v838, %v840
        %v842 = vmax.f32 %v841, 1e-08
        %v843 = vrsqrt.pop %v842
        %v844 = vmul.f32 %v843, %v842
        %v845 = vmul.f32 %v844, %v843
        %v846 = vmul.f32 0.5, %v845
        %v847 = vsub.f32 1.5, %v846
        %v848 = vmul.f32 %v843, %v847
        %v849 = vmul.f32 %v842, %v848
        %vm850 = vcmp.eq.f32.partialorder %v842, inf
        %v851 = vsel %vm850, %v842, %v849
        %vm852 = vcmp.eq.f32.partialorder %v842, 0.0
        %v853 = vand.u32 %v842, 2147483648
        %v854 = vsel %vm852, %v853, %v851
        %v855 = vstv %s636
        %v856 = vmul.f32 %v855, %v650
        %v857 = vstv %s639
        %v858 = vmul.f32 %v857, %v811
        %v859 = vadd.f32 %v856, %v858
        %v860 = vstv %s642
        %v861 = vmul.f32 %v860, %v659
        %v862 = vadd.f32 %v859, %v861
        %v863 = vmax.f32 %v862, 1e-08
        %v864 = vrsqrt.pop %v863
        %v865 = vmul.f32 %v864, %v863
        %v866 = vmul.f32 %v865, %v864
        %v867 = vmul.f32 0.5, %v866
        %v868 = vsub.f32 1.5, %v867
        %v869 = vmul.f32 %v864, %v868
        %v870 = vmul.f32 %v863, %v869
        %vm871 = vcmp.eq.f32.partialorder %v863, inf
        %v872 = vsel %vm871, %v863, %v870
        %vm873 = vcmp.eq.f32.partialorder %v863, 0.0
        %v874 = vand.u32 %v863, 2147483648
        %v875 = vsel %vm873, %v874, %v872
        %v876 = vld [vmem:[%s8] sm:$0xff]
        %v877 = vld [vmem:[%s8 + $0x8] sm:$0xff]
        %v878 = vld [vmem:[%s8 + $0x10] sm:$0xff]
        %v879 = vld [vmem:[%s8 + $0x18] sm:$0xff]
        %v880 = vperm.slane %v618, 0
        %v881 = vlaneseq
        %v882 = vshrl.u32 %v881, 7
        %884 = vset.pattern.permute.xlu0 %v882
        %885 = vperm.xlu0 %884, %v880
        %v886 = vpop.permute.xlu0 %885
        %v887 = vlaneseq
        %v888 = vshrl.u32 %v887, 7
        %v889 = vadd.s32 %v888, 8
        %890 = vset.pattern.permute.xlu0 %v889
        %891 = vperm.xlu0 %890, %v880
        %v892 = vpop.permute.xlu0 %891
        %v893 = vlaneseq
        %v894 = vshrl.u32 %v893, 7
        %v895 = vadd.s32 %v894, 16
        %896 = vset.pattern.permute.xlu0 %v895
        %897 = vperm.xlu0 %896, %v880
        %v898 = vpop.permute.xlu0 %897
        %v899 = vlaneseq
        %v900 = vshrl.u32 %v899, 7
        %v901 = vadd.s32 %v900, 24
        %902 = vset.pattern.permute.xlu0 %v901
        %903 = vperm.xlu0 %902, %v880
        %v904 = vpop.permute.xlu0 %903
        %v905 = vperm.slane %v618, 1
        %v906 = vlaneseq
        %v907 = vshrl.u32 %v906, 7
        %909 = vset.pattern.permute.xlu0 %v907
        %910 = vperm.xlu0 %909, %v905
        %v911 = vpop.permute.xlu0 %910
        %v912 = vlaneseq
        %v913 = vshrl.u32 %v912, 7
        %v914 = vadd.s32 %v913, 8
        %915 = vset.pattern.permute.xlu0 %v914
        %916 = vperm.xlu0 %915, %v905
        %v917 = vpop.permute.xlu0 %916
        %v918 = vlaneseq
        %v919 = vshrl.u32 %v918, 7
        %v920 = vadd.s32 %v919, 16
        %921 = vset.pattern.permute.xlu0 %v920
        %922 = vperm.xlu0 %921, %v905
        %v923 = vpop.permute.xlu0 %922
        %v924 = vlaneseq
        %v925 = vshrl.u32 %v924, 7
        %v926 = vadd.s32 %v925, 24
        %927 = vset.pattern.permute.xlu0 %v926
        %928 = vperm.xlu0 %927, %v905
        %v929 = vpop.permute.xlu0 %928
        %v930 = vperm.slane %v618, 2
        %v931 = vlaneseq
        %v932 = vshrl.u32 %v931, 7
        %934 = vset.pattern.permute.xlu0 %v932
        %935 = vperm.xlu0 %934, %v930
        %v936 = vpop.permute.xlu0 %935
        %v937 = vlaneseq
        %v938 = vshrl.u32 %v937, 7
        %v939 = vadd.s32 %v938, 8
        %940 = vset.pattern.permute.xlu0 %v939
        %941 = vperm.xlu0 %940, %v930
        %v942 = vpop.permute.xlu0 %941
        %v943 = vlaneseq
        %v944 = vshrl.u32 %v943, 7
        %v945 = vadd.s32 %v944, 16
        %946 = vset.pattern.permute.xlu0 %v945
        %947 = vperm.xlu0 %946, %v930
        %v948 = vpop.permute.xlu0 %947
        %v949 = vlaneseq
        %v950 = vshrl.u32 %v949, 7
        %v951 = vadd.s32 %v950, 24
        %952 = vset.pattern.permute.xlu0 %v951
        %953 = vperm.xlu0 %952, %v930
        %v954 = vpop.permute.xlu0 %953
        %v955 = vperm.slane %v618, 3
        %v956 = vlaneseq
        %v957 = vshrl.u32 %v956, 7
        %959 = vset.pattern.permute.xlu0 %v957
        %960 = vperm.xlu0 %959, %v955
        %v961 = vpop.permute.xlu0 %960
        %v962 = vlaneseq
        %v963 = vshrl.u32 %v962, 7
        %v964 = vadd.s32 %v963, 8
        %965 = vset.pattern.permute.xlu0 %v964
        %966 = vperm.xlu0 %965, %v955
        %v967 = vpop.permute.xlu0 %966
        %v968 = vlaneseq
        %v969 = vshrl.u32 %v968, 7
        %v970 = vadd.s32 %v969, 16
        %971 = vset.pattern.permute.xlu0 %v970
        %972 = vperm.xlu0 %971, %v955
        %v973 = vpop.permute.xlu0 %972
        %v974 = vlaneseq
        %v975 = vshrl.u32 %v974, 7
        %v976 = vadd.s32 %v975, 24
        %977 = vset.pattern.permute.xlu0 %v976
        %978 = vperm.xlu0 %977, %v955
        %v979 = vpop.permute.xlu0 %978
        %v980 = vperm.slane %v618, 4
        %v981 = vlaneseq
        %v982 = vshrl.u32 %v981, 7
        %984 = vset.pattern.permute.xlu0 %v982
        %985 = vperm.xlu0 %984, %v980
        %v986 = vpop.permute.xlu0 %985
        %v987 = vlaneseq
        %v988 = vshrl.u32 %v987, 7
        %v989 = vadd.s32 %v988, 8
        %990 = vset.pattern.permute.xlu0 %v989
        %991 = vperm.xlu0 %990, %v980
        %v992 = vpop.permute.xlu0 %991
        %v993 = vlaneseq
        %v994 = vshrl.u32 %v993, 7
        %v995 = vadd.s32 %v994, 16
        %996 = vset.pattern.permute.xlu0 %v995
        %997 = vperm.xlu0 %996, %v980
        %v998 = vpop.permute.xlu0 %997
        %v999 = vlaneseq
        %v1000 = vshrl.u32 %v999, 7
        %v1001 = vadd.s32 %v1000, 24
        %1002 = vset.pattern.permute.xlu0 %v1001
        %1003 = vperm.xlu0 %1002, %v980
        %v1004 = vpop.permute.xlu0 %1003
        %v1005 = vperm.slane %v618, 5
        %v1006 = vlaneseq
        %v1007 = vshrl.u32 %v1006, 7
        %1009 = vset.pattern.permute.xlu0 %v1007
        %1010 = vperm.xlu0 %1009, %v1005
        %v1011 = vpop.permute.xlu0 %1010
        %v1012 = vlaneseq
        %v1013 = vshrl.u32 %v1012, 7
        %v1014 = vadd.s32 %v1013, 8
        %1015 = vset.pattern.permute.xlu0 %v1014
        %1016 = vperm.xlu0 %1015, %v1005
        %v1017 = vpop.permute.xlu0 %1016
        %v1018 = vlaneseq
        %v1019 = vshrl.u32 %v1018, 7
        %v1020 = vadd.s32 %v1019, 16
        %1021 = vset.pattern.permute.xlu0 %v1020
        %1022 = vperm.xlu0 %1021, %v1005
        %v1023 = vpop.permute.xlu0 %1022
        %v1024 = vlaneseq
        %v1025 = vshrl.u32 %v1024, 7
        %v1026 = vadd.s32 %v1025, 24
        %1027 = vset.pattern.permute.xlu0 %v1026
        %1028 = vperm.xlu0 %1027, %v1005
        %v1029 = vpop.permute.xlu0 %1028
        %v1030 = vperm.slane %v618, 6
        %v1031 = vlaneseq
        %v1032 = vshrl.u32 %v1031, 7
        %1034 = vset.pattern.permute.xlu0 %v1032
        %1035 = vperm.xlu0 %1034, %v1030
        %v1036 = vpop.permute.xlu0 %1035
        %v1037 = vlaneseq
        %v1038 = vshrl.u32 %v1037, 7
        %v1039 = vadd.s32 %v1038, 8
        %1040 = vset.pattern.permute.xlu0 %v1039
        %1041 = vperm.xlu0 %1040, %v1030
        %v1042 = vpop.permute.xlu0 %1041
        %v1043 = vlaneseq
        %v1044 = vshrl.u32 %v1043, 7
        %v1045 = vadd.s32 %v1044, 16
        %1046 = vset.pattern.permute.xlu0 %v1045
        %1047 = vperm.xlu0 %1046, %v1030
        %v1048 = vpop.permute.xlu0 %1047
        %v1049 = vlaneseq
        %v1050 = vshrl.u32 %v1049, 7
        %v1051 = vadd.s32 %v1050, 24
        %1052 = vset.pattern.permute.xlu0 %v1051
        %1053 = vperm.xlu0 %1052, %v1030
        %v1054 = vpop.permute.xlu0 %1053
        %v1055 = vperm.slane %v618, 7
        %v1056 = vlaneseq
        %v1057 = vshrl.u32 %v1056, 7
        %1059 = vset.pattern.permute.xlu0 %v1057
        %1060 = vperm.xlu0 %1059, %v1055
        %v1061 = vpop.permute.xlu0 %1060
        %v1062 = vlaneseq
        %v1063 = vshrl.u32 %v1062, 7
        %v1064 = vadd.s32 %v1063, 8
        %1065 = vset.pattern.permute.xlu0 %v1064
        %1066 = vperm.xlu0 %1065, %v1055
        %v1067 = vpop.permute.xlu0 %1066
        %v1068 = vlaneseq
        %v1069 = vshrl.u32 %v1068, 7
        %v1070 = vadd.s32 %v1069, 16
        %1071 = vset.pattern.permute.xlu0 %v1070
        %1072 = vperm.xlu0 %1071, %v1055
        %v1073 = vpop.permute.xlu0 %1072
        %v1074 = vlaneseq
        %v1075 = vshrl.u32 %v1074, 7
        %v1076 = vadd.s32 %v1075, 24
        %1077 = vset.pattern.permute.xlu0 %v1076
        %1078 = vperm.xlu0 %1077, %v1055
        %v1079 = vpop.permute.xlu0 %1078
        %v1080 = vadd.f32 %v886, %v619
        %v1081 = vadd.f32 %v892, %v620
        %v1082 = vadd.f32 %v898, %v621
        %v1083 = vadd.f32 %v904, %v622
        %v1084 = vadd.f32 %v911, %v619
        %v1085 = vadd.f32 %v917, %v620
        %v1086 = vadd.f32 %v923, %v621
        %v1087 = vadd.f32 %v929, %v622
        %v1088 = vadd.f32 %v936, %v619
        %v1089 = vadd.f32 %v942, %v620
        %v1090 = vadd.f32 %v948, %v621
        %v1091 = vadd.f32 %v954, %v622
        %v1092 = vadd.f32 %v961, %v619
        %v1093 = vadd.f32 %v967, %v620
        %v1094 = vadd.f32 %v973, %v621
        %v1095 = vadd.f32 %v979, %v622
        %v1096 = vadd.f32 %v986, %v619
        %v1097 = vadd.f32 %v992, %v620
        %v1098 = vadd.f32 %v998, %v621
        %v1099 = vadd.f32 %v1004, %v622
        %v1100 = vadd.f32 %v1011, %v619
        %v1101 = vadd.f32 %v1017, %v620
        %v1102 = vadd.f32 %v1023, %v621
        %v1103 = vadd.f32 %v1029, %v622
        %v1104 = vadd.f32 %v1036, %v619
        %v1105 = vadd.f32 %v1042, %v620
        %v1106 = vadd.f32 %v1048, %v621
        %v1107 = vadd.f32 %v1054, %v622
        %v1108 = vadd.f32 %v1061, %v619
        %v1109 = vadd.f32 %v1067, %v620
        %v1110 = vadd.f32 %v1073, %v621
        %v1111 = vadd.f32 %v1079, %v622
        %v1113 = vrot.slane %v833, 1
        %v1114 = vrot.slane %v833, 2
        %v1115 = vrot.slane %v833, 3
        %v1116 = vrot.slane %v833, 4
        %v1117 = vrot.slane %v833, 5
        %v1118 = vrot.slane %v833, 6
        %v1119 = vrot.slane %v833, 7
        %1121 = vset.pattern.permute.xlu0 0
        %1122 = vperm.xlu0 %1121, %v876
        %v1123 = vpop.permute.xlu0 %1122
        %1126 = vset.pattern.permute.xlu0 0
        %1127 = vperm.xlu0 %1126, %v877
        %v1128 = vpop.permute.xlu0 %1127
        %1131 = vset.pattern.permute.xlu0 0
        %1132 = vperm.xlu0 %1131, %v878
        %v1133 = vpop.permute.xlu0 %1132
        %1136 = vset.pattern.permute.xlu0 0
        %1137 = vperm.xlu0 %1136, %v879
        %v1138 = vpop.permute.xlu0 %1137
        %v1140 = vperm.slane %v833, 0
        %v1141 = vperm.slane %v1113, 0
        %v1142 = vperm.slane %v1114, 0
        %v1143 = vperm.slane %v1115, 0
        %v1144 = vperm.slane %v1116, 0
        %v1145 = vperm.slane %v1117, 0
        %v1146 = vperm.slane %v1118, 0
        %v1147 = vperm.slane %v1119, 0
        %v1156 = vmul.f32 %v1123, %v1140
        %v1157 = vmul.f32 %v1128, %v1140
        %v1158 = vmul.f32 %v1133, %v1140
        %v1159 = vmul.f32 %v1138, %v1140
        %v1160 = vmul.f32 %v1123, %v1141
        %v1161 = vmul.f32 %v1128, %v1141
        %v1162 = vmul.f32 %v1133, %v1141
        %v1163 = vmul.f32 %v1138, %v1141
        %v1164 = vmul.f32 %v1123, %v1142
        %v1165 = vmul.f32 %v1128, %v1142
        %v1166 = vmul.f32 %v1133, %v1142
        %v1167 = vmul.f32 %v1138, %v1142
        %v1168 = vmul.f32 %v1123, %v1143
        %v1169 = vmul.f32 %v1128, %v1143
        %v1170 = vmul.f32 %v1133, %v1143
        %v1171 = vmul.f32 %v1138, %v1143
        %v1172 = vmul.f32 %v1123, %v1144
        %v1173 = vmul.f32 %v1128, %v1144
        %v1174 = vmul.f32 %v1133, %v1144
        %v1175 = vmul.f32 %v1138, %v1144
        %v1176 = vmul.f32 %v1123, %v1145
        %v1177 = vmul.f32 %v1128, %v1145
        %v1178 = vmul.f32 %v1133, %v1145
        %v1179 = vmul.f32 %v1138, %v1145
        %v1180 = vmul.f32 %v1123, %v1146
        %v1181 = vmul.f32 %v1128, %v1146
        %v1182 = vmul.f32 %v1133, %v1146
        %v1183 = vmul.f32 %v1138, %v1146
        %v1184 = vmul.f32 %v1123, %v1147
        %v1185 = vmul.f32 %v1128, %v1147
        %v1186 = vmul.f32 %v1133, %v1147
        %v1187 = vmul.f32 %v1138, %v1147
        %v1188 = vadd.f32 %v1080, %v1156
        %v1189 = vadd.f32 %v1081, %v1157
        %v1190 = vadd.f32 %v1082, %v1158
        %v1191 = vadd.f32 %v1083, %v1159
        %v1192 = vadd.f32 %v1084, %v1160
        %v1193 = vadd.f32 %v1085, %v1161
        %v1194 = vadd.f32 %v1086, %v1162
        %v1195 = vadd.f32 %v1087, %v1163
        %v1196 = vadd.f32 %v1088, %v1164
        %v1197 = vadd.f32 %v1089, %v1165
        %v1198 = vadd.f32 %v1090, %v1166
        %v1199 = vadd.f32 %v1091, %v1167
        %v1200 = vadd.f32 %v1092, %v1168
        %v1201 = vadd.f32 %v1093, %v1169
        %v1202 = vadd.f32 %v1094, %v1170
        %v1203 = vadd.f32 %v1095, %v1171
        %v1204 = vadd.f32 %v1096, %v1172
        %v1205 = vadd.f32 %v1097, %v1173
        %v1206 = vadd.f32 %v1098, %v1174
        %v1207 = vadd.f32 %v1099, %v1175
        %v1208 = vadd.f32 %v1100, %v1176
        %v1209 = vadd.f32 %v1101, %v1177
        %v1210 = vadd.f32 %v1102, %v1178
        %v1211 = vadd.f32 %v1103, %v1179
        %v1212 = vadd.f32 %v1104, %v1180
        %v1213 = vadd.f32 %v1105, %v1181
        %v1214 = vadd.f32 %v1106, %v1182
        %v1215 = vadd.f32 %v1107, %v1183
        %v1216 = vadd.f32 %v1108, %v1184
        %v1217 = vadd.f32 %v1109, %v1185
        %v1218 = vadd.f32 %v1110, %v1186
        %v1219 = vadd.f32 %v1111, %v1187
        %v1221 = vrot.slane %v854, 1
        %v1222 = vrot.slane %v854, 2
        %v1223 = vrot.slane %v854, 3
        %v1224 = vrot.slane %v854, 4
        %v1225 = vrot.slane %v854, 5
        %v1226 = vrot.slane %v854, 6
        %v1227 = vrot.slane %v854, 7
        %1228 = vset.pattern.permute.xlu0 1
        %1229 = vperm.xlu0 %1228, %v876
        %v1230 = vpop.permute.xlu0 %1229
        %1232 = vset.pattern.permute.xlu0 1
        %1233 = vperm.xlu0 %1232, %v877
        %v1234 = vpop.permute.xlu0 %1233
        %1236 = vset.pattern.permute.xlu0 1
        %1237 = vperm.xlu0 %1236, %v878
        %v1238 = vpop.permute.xlu0 %1237
        %1240 = vset.pattern.permute.xlu0 1
        %1241 = vperm.xlu0 %1240, %v879
        %v1242 = vpop.permute.xlu0 %1241
        %v1244 = vperm.slane %v854, 0
        %v1245 = vperm.slane %v1221, 0
        %v1246 = vperm.slane %v1222, 0
        %v1247 = vperm.slane %v1223, 0
        %v1248 = vperm.slane %v1224, 0
        %v1249 = vperm.slane %v1225, 0
        %v1250 = vperm.slane %v1226, 0
        %v1251 = vperm.slane %v1227, 0
        %v1260 = vmul.f32 %v1230, %v1244
        %v1261 = vmul.f32 %v1234, %v1244
        %v1262 = vmul.f32 %v1238, %v1244
        %v1263 = vmul.f32 %v1242, %v1244
        %v1264 = vmul.f32 %v1230, %v1245
        %v1265 = vmul.f32 %v1234, %v1245
        %v1266 = vmul.f32 %v1238, %v1245
        %v1267 = vmul.f32 %v1242, %v1245
        %v1268 = vmul.f32 %v1230, %v1246
        %v1269 = vmul.f32 %v1234, %v1246
        %v1270 = vmul.f32 %v1238, %v1246
        %v1271 = vmul.f32 %v1242, %v1246
        %v1272 = vmul.f32 %v1230, %v1247
        %v1273 = vmul.f32 %v1234, %v1247
        %v1274 = vmul.f32 %v1238, %v1247
        %v1275 = vmul.f32 %v1242, %v1247
        %v1276 = vmul.f32 %v1230, %v1248
        %v1277 = vmul.f32 %v1234, %v1248
        %v1278 = vmul.f32 %v1238, %v1248
        %v1279 = vmul.f32 %v1242, %v1248
        %v1280 = vmul.f32 %v1230, %v1249
        %v1281 = vmul.f32 %v1234, %v1249
        %v1282 = vmul.f32 %v1238, %v1249
        %v1283 = vmul.f32 %v1242, %v1249
        %v1284 = vmul.f32 %v1230, %v1250
        %v1285 = vmul.f32 %v1234, %v1250
        %v1286 = vmul.f32 %v1238, %v1250
        %v1287 = vmul.f32 %v1242, %v1250
        %v1288 = vmul.f32 %v1230, %v1251
        %v1289 = vmul.f32 %v1234, %v1251
        %v1290 = vmul.f32 %v1238, %v1251
        %v1291 = vmul.f32 %v1242, %v1251
        %v1292 = vadd.f32 %v1188, %v1260
        %v1293 = vadd.f32 %v1189, %v1261
        %v1294 = vadd.f32 %v1190, %v1262
        %v1295 = vadd.f32 %v1191, %v1263
        %v1296 = vadd.f32 %v1192, %v1264
        %v1297 = vadd.f32 %v1193, %v1265
        %v1298 = vadd.f32 %v1194, %v1266
        %v1299 = vadd.f32 %v1195, %v1267
        %v1300 = vadd.f32 %v1196, %v1268
        %v1301 = vadd.f32 %v1197, %v1269
        %v1302 = vadd.f32 %v1198, %v1270
        %v1303 = vadd.f32 %v1199, %v1271
        %v1304 = vadd.f32 %v1200, %v1272
        %v1305 = vadd.f32 %v1201, %v1273
        %v1306 = vadd.f32 %v1202, %v1274
        %v1307 = vadd.f32 %v1203, %v1275
        %v1308 = vadd.f32 %v1204, %v1276
        %v1309 = vadd.f32 %v1205, %v1277
        %v1310 = vadd.f32 %v1206, %v1278
        %v1311 = vadd.f32 %v1207, %v1279
        %v1312 = vadd.f32 %v1208, %v1280
        %v1313 = vadd.f32 %v1209, %v1281
        %v1314 = vadd.f32 %v1210, %v1282
        %v1315 = vadd.f32 %v1211, %v1283
        %v1316 = vadd.f32 %v1212, %v1284
        %v1317 = vadd.f32 %v1213, %v1285
        %v1318 = vadd.f32 %v1214, %v1286
        %v1319 = vadd.f32 %v1215, %v1287
        %v1320 = vadd.f32 %v1216, %v1288
        %v1321 = vadd.f32 %v1217, %v1289
        %v1322 = vadd.f32 %v1218, %v1290
        %v1323 = vadd.f32 %v1219, %v1291
        %v1325 = vrot.slane %v875, 1
        %v1326 = vrot.slane %v875, 2
        %v1327 = vrot.slane %v875, 3
        %v1328 = vrot.slane %v875, 4
        %v1329 = vrot.slane %v875, 5
        %v1330 = vrot.slane %v875, 6
        %v1331 = vrot.slane %v875, 7
        %1332 = vset.pattern.permute.xlu0 2
        %1333 = vperm.xlu0 %1332, %v876
        %v1334 = vpop.permute.xlu0 %1333
        %1336 = vset.pattern.permute.xlu0 2
        %1337 = vperm.xlu0 %1336, %v877
        %v1338 = vpop.permute.xlu0 %1337
        %1340 = vset.pattern.permute.xlu0 2
        %1341 = vperm.xlu0 %1340, %v878
        %v1342 = vpop.permute.xlu0 %1341
        %1344 = vset.pattern.permute.xlu0 2
        %1345 = vperm.xlu0 %1344, %v879
        %v1346 = vpop.permute.xlu0 %1345
        %v1348 = vperm.slane %v875, 0
        %v1349 = vperm.slane %v1325, 0
        %v1350 = vperm.slane %v1326, 0
        %v1351 = vperm.slane %v1327, 0
        %v1352 = vperm.slane %v1328, 0
        %v1353 = vperm.slane %v1329, 0
        %v1354 = vperm.slane %v1330, 0
        %v1355 = vperm.slane %v1331, 0
        %v1364 = vmul.f32 %v1334, %v1348
        %v1365 = vmul.f32 %v1338, %v1348
        %v1366 = vmul.f32 %v1342, %v1348
        %v1367 = vmul.f32 %v1346, %v1348
        %v1368 = vmul.f32 %v1334, %v1349
        %v1369 = vmul.f32 %v1338, %v1349
        %v1370 = vmul.f32 %v1342, %v1349
        %v1371 = vmul.f32 %v1346, %v1349
        %v1372 = vmul.f32 %v1334, %v1350
        %v1373 = vmul.f32 %v1338, %v1350
        %v1374 = vmul.f32 %v1342, %v1350
        %v1375 = vmul.f32 %v1346, %v1350
        %v1376 = vmul.f32 %v1334, %v1351
        %v1377 = vmul.f32 %v1338, %v1351
        %v1378 = vmul.f32 %v1342, %v1351
        %v1379 = vmul.f32 %v1346, %v1351
        %v1380 = vmul.f32 %v1334, %v1352
        %v1381 = vmul.f32 %v1338, %v1352
        %v1382 = vmul.f32 %v1342, %v1352
        %v1383 = vmul.f32 %v1346, %v1352
        %v1384 = vmul.f32 %v1334, %v1353
        %v1385 = vmul.f32 %v1338, %v1353
        %v1386 = vmul.f32 %v1342, %v1353
        %v1387 = vmul.f32 %v1346, %v1353
        %v1388 = vmul.f32 %v1334, %v1354
        %v1389 = vmul.f32 %v1338, %v1354
        %v1390 = vmul.f32 %v1342, %v1354
        %v1391 = vmul.f32 %v1346, %v1354
        %v1392 = vmul.f32 %v1334, %v1355
        %v1393 = vmul.f32 %v1338, %v1355
        %v1394 = vmul.f32 %v1342, %v1355
        %v1395 = vmul.f32 %v1346, %v1355
        %v1396 = vadd.f32 %v1292, %v1364
        %v1397 = vadd.f32 %v1293, %v1365
        %v1398 = vadd.f32 %v1294, %v1366
        %v1399 = vadd.f32 %v1295, %v1367
        %v1400 = vadd.f32 %v1296, %v1368
        %v1401 = vadd.f32 %v1297, %v1369
        %v1402 = vadd.f32 %v1298, %v1370
        %v1403 = vadd.f32 %v1299, %v1371
        %v1404 = vadd.f32 %v1300, %v1372
        %v1405 = vadd.f32 %v1301, %v1373
        %v1406 = vadd.f32 %v1302, %v1374
        %v1407 = vadd.f32 %v1303, %v1375
        %v1408 = vadd.f32 %v1304, %v1376
        %v1409 = vadd.f32 %v1305, %v1377
        %v1410 = vadd.f32 %v1306, %v1378
        %v1411 = vadd.f32 %v1307, %v1379
        %v1412 = vadd.f32 %v1308, %v1380
        %v1413 = vadd.f32 %v1309, %v1381
        %v1414 = vadd.f32 %v1310, %v1382
        %v1415 = vadd.f32 %v1311, %v1383
        %v1416 = vadd.f32 %v1312, %v1384
        %v1417 = vadd.f32 %v1313, %v1385
        %v1418 = vadd.f32 %v1314, %v1386
        %v1419 = vadd.f32 %v1315, %v1387
        %v1420 = vadd.f32 %v1316, %v1388
        %v1421 = vadd.f32 %v1317, %v1389
        %v1422 = vadd.f32 %v1318, %v1390
        %v1423 = vadd.f32 %v1319, %v1391
        %v1424 = vadd.f32 %v1320, %v1392
        %v1425 = vadd.f32 %v1321, %v1393
        %v1426 = vadd.f32 %v1322, %v1394
        %v1427 = vadd.f32 %v1323, %v1395
        %v1428 = vsub.f32 0.0, %v1396
        %v1429 = vsub.f32 0.0, %v1397
        %v1430 = vsub.f32 0.0, %v1398
        %v1431 = vsub.f32 0.0, %v1399
        %v1432 = vsub.f32 0.0, %v1400
        %v1433 = vsub.f32 0.0, %v1401
        %v1434 = vsub.f32 0.0, %v1402
        %v1435 = vsub.f32 0.0, %v1403
        %v1436 = vsub.f32 0.0, %v1404
        %v1437 = vsub.f32 0.0, %v1405
        %v1438 = vsub.f32 0.0, %v1406
        %v1439 = vsub.f32 0.0, %v1407
        %v1440 = vsub.f32 0.0, %v1408
        %v1441 = vsub.f32 0.0, %v1409
        %v1442 = vsub.f32 0.0, %v1410
        %v1443 = vsub.f32 0.0, %v1411
        %v1444 = vsub.f32 0.0, %v1412
        %v1445 = vsub.f32 0.0, %v1413
        %v1446 = vsub.f32 0.0, %v1414
        %v1447 = vsub.f32 0.0, %v1415
        %v1448 = vsub.f32 0.0, %v1416
        %v1449 = vsub.f32 0.0, %v1417
        %v1450 = vsub.f32 0.0, %v1418
        %v1451 = vsub.f32 0.0, %v1419
        %v1452 = vsub.f32 0.0, %v1420
        %v1453 = vsub.f32 0.0, %v1421
        %v1454 = vsub.f32 0.0, %v1422
        %v1455 = vsub.f32 0.0, %v1423
        %v1456 = vsub.f32 0.0, %v1424
        %v1457 = vsub.f32 0.0, %v1425
        %v1458 = vsub.f32 0.0, %v1426
        %v1459 = vsub.f32 0.0, %v1427
        %v1460 = vmul.f32 %v1428, 1.442695
        %v1461 = vpow.pop %v1460
        %v1462 = vmul.f32 %v1429, 1.442695
        %v1463 = vpow.pop %v1462
        %v1464 = vmul.f32 %v1430, 1.442695
        %v1465 = vpow.pop %v1464
        %v1466 = vmul.f32 %v1431, 1.442695
        %v1467 = vpow.pop %v1466
        %v1468 = vmul.f32 %v1432, 1.442695
        %v1469 = vpow.pop %v1468
        %v1470 = vmul.f32 %v1433, 1.442695
        %v1471 = vpow.pop %v1470
        %v1472 = vmul.f32 %v1434, 1.442695
        %v1473 = vpow.pop %v1472
        %v1474 = vmul.f32 %v1435, 1.442695
        %v1475 = vpow.pop %v1474
        %v1476 = vmul.f32 %v1436, 1.442695
        %v1477 = vpow.pop %v1476
        %v1478 = vmul.f32 %v1437, 1.442695
        %v1479 = vpow.pop %v1478
        %v1480 = vmul.f32 %v1438, 1.442695
        %v1481 = vpow.pop %v1480
        %v1482 = vmul.f32 %v1439, 1.442695
        %v1483 = vpow.pop %v1482
        %v1484 = vmul.f32 %v1440, 1.442695
        %v1485 = vpow.pop %v1484
        %v1486 = vmul.f32 %v1441, 1.442695
        %v1487 = vpow.pop %v1486
        %v1488 = vmul.f32 %v1442, 1.442695
        %v1489 = vpow.pop %v1488
        %v1490 = vmul.f32 %v1443, 1.442695
        %v1491 = vpow.pop %v1490
        %v1492 = vmul.f32 %v1444, 1.442695
        %v1493 = vpow.pop %v1492
        %v1494 = vmul.f32 %v1445, 1.442695
        %v1495 = vpow.pop %v1494
        %v1496 = vmul.f32 %v1446, 1.442695
        %v1497 = vpow.pop %v1496
        %v1498 = vmul.f32 %v1447, 1.442695
        %v1499 = vpow.pop %v1498
        %v1500 = vmul.f32 %v1448, 1.442695
        %v1501 = vpow.pop %v1500
        %v1502 = vmul.f32 %v1449, 1.442695
        %v1503 = vpow.pop %v1502
        %v1504 = vmul.f32 %v1450, 1.442695
        %v1505 = vpow.pop %v1504
        %v1506 = vmul.f32 %v1451, 1.442695
        %v1507 = vpow.pop %v1506
        %v1508 = vmul.f32 %v1452, 1.442695
        %v1509 = vpow.pop %v1508
        %v1510 = vmul.f32 %v1453, 1.442695
        %v1511 = vpow.pop %v1510
        %v1512 = vmul.f32 %v1454, 1.442695
        %v1513 = vpow.pop %v1512
        %v1514 = vmul.f32 %v1455, 1.442695
        %v1515 = vpow.pop %v1514
        %v1516 = vmul.f32 %v1456, 1.442695
        %v1517 = vpow.pop %v1516
        %v1518 = vmul.f32 %v1457, 1.442695
        %v1519 = vpow.pop %v1518
        %v1520 = vmul.f32 %v1458, 1.442695
        %v1521 = vpow.pop %v1520
        %v1522 = vmul.f32 %v1459, 1.442695
        %v1523 = vpow.pop %v1522
        %v1524 = vadd.f32 %v1461, 1.0
        %v1525 = vadd.f32 %v1463, 1.0
        %v1526 = vadd.f32 %v1465, 1.0
        %v1527 = vadd.f32 %v1467, 1.0
        %v1528 = vadd.f32 %v1469, 1.0
        %v1529 = vadd.f32 %v1471, 1.0
        %v1530 = vadd.f32 %v1473, 1.0
        %v1531 = vadd.f32 %v1475, 1.0
        %v1532 = vadd.f32 %v1477, 1.0
        %v1533 = vadd.f32 %v1479, 1.0
        %v1534 = vadd.f32 %v1481, 1.0
        %v1535 = vadd.f32 %v1483, 1.0
        %v1536 = vadd.f32 %v1485, 1.0
        %v1537 = vadd.f32 %v1487, 1.0
        %v1538 = vadd.f32 %v1489, 1.0
        %v1539 = vadd.f32 %v1491, 1.0
        %v1540 = vadd.f32 %v1493, 1.0
        %v1541 = vadd.f32 %v1495, 1.0
        %v1542 = vadd.f32 %v1497, 1.0
        %v1543 = vadd.f32 %v1499, 1.0
        %v1544 = vadd.f32 %v1501, 1.0
        %v1545 = vadd.f32 %v1503, 1.0
        %v1546 = vadd.f32 %v1505, 1.0
        %v1547 = vadd.f32 %v1507, 1.0
        %v1548 = vadd.f32 %v1509, 1.0
        %v1549 = vadd.f32 %v1511, 1.0
        %v1550 = vadd.f32 %v1513, 1.0
        %v1551 = vadd.f32 %v1515, 1.0
        %v1552 = vadd.f32 %v1517, 1.0
        %v1553 = vadd.f32 %v1519, 1.0
        %v1554 = vadd.f32 %v1521, 1.0
        %v1555 = vadd.f32 %v1523, 1.0
        %v1556 = vrcp.pop %v1524
        %v1557 = vrcp.pop %v1525
        %v1558 = vrcp.pop %v1526
        %v1559 = vrcp.pop %v1527
        %v1560 = vrcp.pop %v1528
        %v1561 = vrcp.pop %v1529
        %v1562 = vrcp.pop %v1530
        %v1563 = vrcp.pop %v1531
        %v1564 = vrcp.pop %v1532
        %v1565 = vrcp.pop %v1533
        %v1566 = vrcp.pop %v1534
        %v1567 = vrcp.pop %v1535
        %v1568 = vrcp.pop %v1536
        %v1569 = vrcp.pop %v1537
        %v1570 = vrcp.pop %v1538
        %v1571 = vrcp.pop %v1539
        %v1572 = vrcp.pop %v1540
        %v1573 = vrcp.pop %v1541
        %v1574 = vrcp.pop %v1542
        %v1575 = vrcp.pop %v1543
        %v1576 = vrcp.pop %v1544
        %v1577 = vrcp.pop %v1545
        %v1578 = vrcp.pop %v1546
        %v1579 = vrcp.pop %v1547
        %v1580 = vrcp.pop %v1548
        %v1581 = vrcp.pop %v1549
        %v1582 = vrcp.pop %v1550
        %v1583 = vrcp.pop %v1551
        %v1584 = vrcp.pop %v1552
        %v1585 = vrcp.pop %v1553
        %v1586 = vrcp.pop %v1554
        %v1587 = vrcp.pop %v1555
        %v1588 = vld [vmem:[%s9] sm:$0xff]
        %v1589 = vld [vmem:[%s9 + $0x8] sm:$0xff]
        %v1590 = vld [vmem:[%s9 + $0x10] sm:$0xff]
        %v1591 = vld [vmem:[%s9 + $0x18] sm:$0xff]
        %1593 = vset.pattern.permute.xlu0 0
        %1594 = vperm.xlu0 %1593, %v1588
        %v1595 = vpop.permute.xlu0 %1594
        %1598 = vset.pattern.permute.xlu0 0
        %1599 = vperm.xlu0 %1598, %v1589
        %v1600 = vpop.permute.xlu0 %1599
        %1603 = vset.pattern.permute.xlu0 0
        %1604 = vperm.xlu0 %1603, %v1590
        %v1605 = vpop.permute.xlu0 %1604
        %1608 = vset.pattern.permute.xlu0 0
        %1609 = vperm.xlu0 %1608, %v1591
        %v1610 = vpop.permute.xlu0 %1609
        %v1612 = vmul.f32 %v1556, %v1595
        %v1613 = vmul.f32 %v1557, %v1600
        %v1614 = vmul.f32 %v1558, %v1605
        %v1615 = vmul.f32 %v1559, %v1610
        %v1616 = vmul.f32 %v1560, %v1595
        %v1617 = vmul.f32 %v1561, %v1600
        %v1618 = vmul.f32 %v1562, %v1605
        %v1619 = vmul.f32 %v1563, %v1610
        %v1620 = vmul.f32 %v1564, %v1595
        %v1621 = vmul.f32 %v1565, %v1600
        %v1622 = vmul.f32 %v1566, %v1605
        %v1623 = vmul.f32 %v1567, %v1610
        %v1624 = vmul.f32 %v1568, %v1595
        %v1625 = vmul.f32 %v1569, %v1600
        %v1626 = vmul.f32 %v1570, %v1605
        %v1627 = vmul.f32 %v1571, %v1610
        %v1628 = vmul.f32 %v1572, %v1595
        %v1629 = vmul.f32 %v1573, %v1600
        %v1630 = vmul.f32 %v1574, %v1605
        %v1631 = vmul.f32 %v1575, %v1610
        %v1632 = vmul.f32 %v1576, %v1595
        %v1633 = vmul.f32 %v1577, %v1600
        %v1634 = vmul.f32 %v1578, %v1605
        %v1635 = vmul.f32 %v1579, %v1610
        %v1636 = vmul.f32 %v1580, %v1595
        %v1637 = vmul.f32 %v1581, %v1600
        %v1638 = vmul.f32 %v1582, %v1605
        %v1639 = vmul.f32 %v1583, %v1610
        %v1640 = vmul.f32 %v1584, %v1595
        %v1641 = vmul.f32 %v1585, %v1600
        %v1642 = vmul.f32 %v1586, %v1605
        %v1643 = vmul.f32 %v1587, %v1610
        %vm1644 = vcmask 64512
        %v1645 = vsel %vm1644, %v1612, 0.0
        %v1646 = vsel %vm1644, %v1613, 0.0
        %v1647 = vadd.f32 %v1645, %v1646
        %v1648 = vsel %vm1644, %v1614, 0.0
        %v1649 = vadd.f32 %v1647, %v1648
        %v1650 = vsel %vm1644, %v1615, 0.0
        %v1651 = vadd.f32 %v1649, %v1650
        %v1652 = vrot.slane %v1651, 4
        %v1653 = vadd.f32 %v1651, %v1652
        %v1654 = vrot.slane %v1653, 2
        %v1655 = vadd.f32 %v1653, %v1654
        %v1656 = vrot.slane %v1655, 1
        %v1657 = vadd.f32 %v1655, %v1656
        %v1658 = vsel %vm1644, %v1616, 0.0
        %v1659 = vsel %vm1644, %v1617, 0.0
        %v1660 = vadd.f32 %v1658, %v1659
        %v1661 = vsel %vm1644, %v1618, 0.0
        %v1662 = vadd.f32 %v1660, %v1661
        %v1663 = vsel %vm1644, %v1619, 0.0
        %v1664 = vadd.f32 %v1662, %v1663
        %v1665 = vrot.slane %v1664, 4
        %v1666 = vadd.f32 %v1664, %v1665
        %v1667 = vrot.slane %v1666, 2
        %v1668 = vadd.f32 %v1666, %v1667
        %v1669 = vrot.slane %v1668, 1
        %v1670 = vadd.f32 %v1668, %v1669
        %v1671 = vsel %vm1644, %v1620, 0.0
        %v1672 = vsel %vm1644, %v1621, 0.0
        %v1673 = vadd.f32 %v1671, %v1672
        %v1674 = vsel %vm1644, %v1622, 0.0
        %v1675 = vadd.f32 %v1673, %v1674
        %v1676 = vsel %vm1644, %v1623, 0.0
        %v1677 = vadd.f32 %v1675, %v1676
        %v1678 = vrot.slane %v1677, 4
        %v1679 = vadd.f32 %v1677, %v1678
        %v1680 = vrot.slane %v1679, 2
        %v1681 = vadd.f32 %v1679, %v1680
        %v1682 = vrot.slane %v1681, 1
        %v1683 = vadd.f32 %v1681, %v1682
        %v1684 = vsel %vm1644, %v1624, 0.0
        %v1685 = vsel %vm1644, %v1625, 0.0
        %v1686 = vadd.f32 %v1684, %v1685
        %v1687 = vsel %vm1644, %v1626, 0.0
        %v1688 = vadd.f32 %v1686, %v1687
        %v1689 = vsel %vm1644, %v1627, 0.0
        %v1690 = vadd.f32 %v1688, %v1689
        %v1691 = vrot.slane %v1690, 4
        %v1692 = vadd.f32 %v1690, %v1691
        %v1693 = vrot.slane %v1692, 2
        %v1694 = vadd.f32 %v1692, %v1693
        %v1695 = vrot.slane %v1694, 1
        %v1696 = vadd.f32 %v1694, %v1695
        %v1697 = vsel %vm1644, %v1628, 0.0
        %v1698 = vsel %vm1644, %v1629, 0.0
        %v1699 = vadd.f32 %v1697, %v1698
        %v1700 = vsel %vm1644, %v1630, 0.0
        %v1701 = vadd.f32 %v1699, %v1700
        %v1702 = vsel %vm1644, %v1631, 0.0
        %v1703 = vadd.f32 %v1701, %v1702
        %v1704 = vrot.slane %v1703, 4
        %v1705 = vadd.f32 %v1703, %v1704
        %v1706 = vrot.slane %v1705, 2
        %v1707 = vadd.f32 %v1705, %v1706
        %v1708 = vrot.slane %v1707, 1
        %v1709 = vadd.f32 %v1707, %v1708
        %v1710 = vsel %vm1644, %v1632, 0.0
        %v1711 = vsel %vm1644, %v1633, 0.0
        %v1712 = vadd.f32 %v1710, %v1711
        %v1713 = vsel %vm1644, %v1634, 0.0
        %v1714 = vadd.f32 %v1712, %v1713
        %v1715 = vsel %vm1644, %v1635, 0.0
        %v1716 = vadd.f32 %v1714, %v1715
        %v1717 = vrot.slane %v1716, 4
        %v1718 = vadd.f32 %v1716, %v1717
        %v1719 = vrot.slane %v1718, 2
        %v1720 = vadd.f32 %v1718, %v1719
        %v1721 = vrot.slane %v1720, 1
        %v1722 = vadd.f32 %v1720, %v1721
        %v1723 = vsel %vm1644, %v1636, 0.0
        %v1724 = vsel %vm1644, %v1637, 0.0
        %v1725 = vadd.f32 %v1723, %v1724
        %v1726 = vsel %vm1644, %v1638, 0.0
        %v1727 = vadd.f32 %v1725, %v1726
        %v1728 = vsel %vm1644, %v1639, 0.0
        %v1729 = vadd.f32 %v1727, %v1728
        %v1730 = vrot.slane %v1729, 4
        %v1731 = vadd.f32 %v1729, %v1730
        %v1732 = vrot.slane %v1731, 2
        %v1733 = vadd.f32 %v1731, %v1732
        %v1734 = vrot.slane %v1733, 1
        %v1735 = vadd.f32 %v1733, %v1734
        %v1736 = vsel %vm1644, %v1640, 0.0
        %v1737 = vsel %vm1644, %v1641, 0.0
        %v1738 = vadd.f32 %v1736, %v1737
        %v1739 = vsel %vm1644, %v1642, 0.0
        %v1740 = vadd.f32 %v1738, %v1739
        %v1741 = vsel %vm1644, %v1643, 0.0
        %v1742 = vadd.f32 %v1740, %v1741
        %v1743 = vrot.slane %v1742, 4
        %v1744 = vadd.f32 %v1742, %v1743
        %v1745 = vrot.slane %v1744, 2
        %v1746 = vadd.f32 %v1744, %v1745
        %v1747 = vrot.slane %v1746, 1
        %v1748 = vadd.f32 %v1746, %v1747
        %v1749 = vstv %s645
        %v1750 = vadd.f32 %v1657, %v1749
        %v1751 = vadd.f32 %v1670, %v1749
        %v1752 = vadd.f32 %v1683, %v1749
        %v1753 = vadd.f32 %v1696, %v1749
        %v1754 = vadd.f32 %v1709, %v1749
        %v1755 = vadd.f32 %v1722, %v1749
        %v1756 = vadd.f32 %v1735, %v1749
        %v1757 = vadd.f32 %v1748, %v1749
        %v1758 = vxor.u32 %v1750, 2147483648
        %v1759 = vxor.u32 %v1751, 2147483648
        %v1760 = vxor.u32 %v1752, 2147483648
        %v1761 = vxor.u32 %v1753, 2147483648
        %v1762 = vxor.u32 %v1754, 2147483648
        %v1763 = vxor.u32 %v1755, 2147483648
        %v1764 = vxor.u32 %v1756, 2147483648
        %v1765 = vxor.u32 %v1757, 2147483648
        %v1766 = vmul.f32 %v1758, 1.442695
        %v1767 = vpow.pop %v1766
        %v1768 = vmul.f32 %v1759, 1.442695
        %v1769 = vpow.pop %v1768
        %v1770 = vmul.f32 %v1760, 1.442695
        %v1771 = vpow.pop %v1770
        %v1772 = vmul.f32 %v1761, 1.442695
        %v1773 = vpow.pop %v1772
        %v1774 = vmul.f32 %v1762, 1.442695
        %v1775 = vpow.pop %v1774
        %v1776 = vmul.f32 %v1763, 1.442695
        %v1777 = vpow.pop %v1776
        %v1778 = vmul.f32 %v1764, 1.442695
        %v1779 = vpow.pop %v1778
        %v1780 = vmul.f32 %v1765, 1.442695
        %v1781 = vpow.pop %v1780
        %v1782 = vadd.f32 %v1767, 1.0
        %v1783 = vadd.f32 %v1769, 1.0
        %v1784 = vadd.f32 %v1771, 1.0
        %v1785 = vadd.f32 %v1773, 1.0
        %v1786 = vadd.f32 %v1775, 1.0
        %v1787 = vadd.f32 %v1777, 1.0
        %v1788 = vadd.f32 %v1779, 1.0
        %v1789 = vadd.f32 %v1781, 1.0
        %v1790 = vrcp.pop %v1782
        %v1791 = vmul.f32 %v1782, %v1790
        %v1792 = vsub.f32 1.0, %v1791
        %v1793 = vmul.f32 %v1790, %v1792
        %v1794 = vadd.f32 %v1790, %v1793
        %vm1795 = vweird.f32 %v1782
        %vm1796 = vweird.f32 %v1790
        %vm1797 = vmor %vm1795, %vm1796
        %v1798 = vsel %vm1797, %v1790, %v1794
        %v1799 = vand.u32 2147483647, %v1782
        %vm1800 = vcmp.eq.f32.partialorder %v1799, 8.507059e+37
        %v1801 = vand.u32 %v1782, 2147483648
        %v1802 = vor.u32 1.1754944e-38, %v1801
        %v1803 = vsel %vm1800, %v1802, %v1798
        %v1804 = vmul.f32 1.0, %v1803
        %v1805 = vrcp.pop %v1783
        %v1806 = vmul.f32 %v1783, %v1805
        %v1807 = vsub.f32 1.0, %v1806
        %v1808 = vmul.f32 %v1805, %v1807
        %v1809 = vadd.f32 %v1805, %v1808
        %vm1810 = vweird.f32 %v1783
        %vm1811 = vweird.f32 %v1805
        %vm1812 = vmor %vm1810, %vm1811
        %v1813 = vsel %vm1812, %v1805, %v1809
        %v1814 = vand.u32 2147483647, %v1783
        %vm1815 = vcmp.eq.f32.partialorder %v1814, 8.507059e+37
        %v1816 = vand.u32 %v1783, 2147483648
        %v1817 = vor.u32 1.1754944e-38, %v1816
        %v1818 = vsel %vm1815, %v1817, %v1813
        %v1819 = vmul.f32 1.0, %v1818
        %v1820 = vrcp.pop %v1784
        %v1821 = vmul.f32 %v1784, %v1820
        %v1822 = vsub.f32 1.0, %v1821
        %v1823 = vmul.f32 %v1820, %v1822
        %v1824 = vadd.f32 %v1820, %v1823
        %vm1825 = vweird.f32 %v1784
        %vm1826 = vweird.f32 %v1820
        %vm1827 = vmor %vm1825, %vm1826
        %v1828 = vsel %vm1827, %v1820, %v1824
        %v1829 = vand.u32 2147483647, %v1784
        %vm1830 = vcmp.eq.f32.partialorder %v1829, 8.507059e+37
        %v1831 = vand.u32 %v1784, 2147483648
        %v1832 = vor.u32 1.1754944e-38, %v1831
        %v1833 = vsel %vm1830, %v1832, %v1828
        %v1834 = vmul.f32 1.0, %v1833
        %v1835 = vrcp.pop %v1785
        %v1836 = vmul.f32 %v1785, %v1835
        %v1837 = vsub.f32 1.0, %v1836
        %v1838 = vmul.f32 %v1835, %v1837
        %v1839 = vadd.f32 %v1835, %v1838
        %vm1840 = vweird.f32 %v1785
        %vm1841 = vweird.f32 %v1835
        %vm1842 = vmor %vm1840, %vm1841
        %v1843 = vsel %vm1842, %v1835, %v1839
        %v1844 = vand.u32 2147483647, %v1785
        %vm1845 = vcmp.eq.f32.partialorder %v1844, 8.507059e+37
        %v1846 = vand.u32 %v1785, 2147483648
        %v1847 = vor.u32 1.1754944e-38, %v1846
        %v1848 = vsel %vm1845, %v1847, %v1843
        %v1849 = vmul.f32 1.0, %v1848
        %v1850 = vrcp.pop %v1786
        %v1851 = vmul.f32 %v1786, %v1850
        %v1852 = vsub.f32 1.0, %v1851
        %v1853 = vmul.f32 %v1850, %v1852
        %v1854 = vadd.f32 %v1850, %v1853
        %vm1855 = vweird.f32 %v1786
        %vm1856 = vweird.f32 %v1850
        %vm1857 = vmor %vm1855, %vm1856
        %v1858 = vsel %vm1857, %v1850, %v1854
        %v1859 = vand.u32 2147483647, %v1786
        %vm1860 = vcmp.eq.f32.partialorder %v1859, 8.507059e+37
        %v1861 = vand.u32 %v1786, 2147483648
        %v1862 = vor.u32 1.1754944e-38, %v1861
        %v1863 = vsel %vm1860, %v1862, %v1858
        %v1864 = vmul.f32 1.0, %v1863
        %v1865 = vrcp.pop %v1787
        %v1866 = vmul.f32 %v1787, %v1865
        %v1867 = vsub.f32 1.0, %v1866
        %v1868 = vmul.f32 %v1865, %v1867
        %v1869 = vadd.f32 %v1865, %v1868
        %vm1870 = vweird.f32 %v1787
        %vm1871 = vweird.f32 %v1865
        %vm1872 = vmor %vm1870, %vm1871
        %v1873 = vsel %vm1872, %v1865, %v1869
        %v1874 = vand.u32 2147483647, %v1787
        %vm1875 = vcmp.eq.f32.partialorder %v1874, 8.507059e+37
        %v1876 = vand.u32 %v1787, 2147483648
        %v1877 = vor.u32 1.1754944e-38, %v1876
        %v1878 = vsel %vm1875, %v1877, %v1873
        %v1879 = vmul.f32 1.0, %v1878
        %v1880 = vrcp.pop %v1788
        %v1881 = vmul.f32 %v1788, %v1880
        %v1882 = vsub.f32 1.0, %v1881
        %v1883 = vmul.f32 %v1880, %v1882
        %v1884 = vadd.f32 %v1880, %v1883
        %vm1885 = vweird.f32 %v1788
        %vm1886 = vweird.f32 %v1880
        %vm1887 = vmor %vm1885, %vm1886
        %v1888 = vsel %vm1887, %v1880, %v1884
        %v1889 = vand.u32 2147483647, %v1788
        %vm1890 = vcmp.eq.f32.partialorder %v1889, 8.507059e+37
        %v1891 = vand.u32 %v1788, 2147483648
        %v1892 = vor.u32 1.1754944e-38, %v1891
        %v1893 = vsel %vm1890, %v1892, %v1888
        %v1894 = vmul.f32 1.0, %v1893
        %v1895 = vrcp.pop %v1789
        %v1896 = vmul.f32 %v1789, %v1895
        %v1897 = vsub.f32 1.0, %v1896
        %v1898 = vmul.f32 %v1895, %v1897
        %v1899 = vadd.f32 %v1895, %v1898
        %vm1900 = vweird.f32 %v1789
        %vm1901 = vweird.f32 %v1895
        %vm1902 = vmor %vm1900, %vm1901
        %v1903 = vsel %vm1902, %v1895, %v1899
        %v1904 = vand.u32 2147483647, %v1789
        %vm1905 = vcmp.eq.f32.partialorder %v1904, 8.507059e+37
        %v1906 = vand.u32 %v1789, 2147483648
        %v1907 = vor.u32 1.1754944e-38, %v1906
        %v1908 = vsel %vm1905, %v1907, %v1903
        %v1909 = vmul.f32 1.0, %v1908
        %v1911 = vperm.slane %v623, 0
        %vm1921 = vcmask 1041409
        %v1922 = vsel %vm1921, %v1819, %v1804
        %vm1923 = vcmask 1042434
        %v1924 = vsel %vm1923, %v1834, %v1922
        %vm1925 = vcmask 1043459
        %v1926 = vsel %vm1925, %v1849, %v1924
        %vm1927 = vcmask 1044484
        %v1928 = vsel %vm1927, %v1864, %v1926
        %vm1929 = vcmask 1045509
        %v1930 = vsel %vm1929, %v1879, %v1928
        %vm1931 = vcmask 1046534
        %v1932 = vsel %vm1931, %v1894, %v1930
        %vm1933 = vcmask 1047559
        %v1934 = vsel %vm1933, %v1909, %v1932
        %v1936 = vmul.f32 %v1911, %v1934
        %v1937 = vld [vmem:[#allocation3] sm:$0xff]
        %v1938 = vsel %vm1644, %v1936, 0.0
        %1939 = vadd.xlane.f32.xlu0 %v1938
        %v1940 = vpop.xlane.xlu0 %1939
        %v1941 = vadd.f32 %v1937, %v1940
        %vm1942 = vcmask 7168
        %1943 = vst.msk [vmem:[#allocation3] sm:$0xff] %vm1942, %v1941
        %v1944 = vld [vmem:[#allocation4] sm:$0xff]
        %v1946 = vsel %vm1644, %v1936, 0
        %1948 = vmatpush.msra.mxu0 0.0
        %1949 = vmatpush.msra.mxu0 0.0
        %1950 = vmatpush.msra.mxu0 0.0
        %1951 = vmatpush.msra.mxu0 0.0
        %1952 = vmatpush.msra.mxu0 0.0
        %1953 = vmatpush.msra.mxu0 0.0
        %1954 = vmatpush.msra.mxu0 0.0
        %1955 = vmatpush.msra.mxu0 0.0
        %1956 = vmatpush.msra.mxu0 0.0
        %1957 = vmatpush.msra.mxu0 0.0
        %1958 = vmatpush.msra.mxu0 0.0
        %1959 = vmatpush.msra.mxu0 0.0
        %1960 = vmatpush.msra.mxu0 0.0
        %1961 = vmatpush.msra.mxu0 0.0
        %1962 = vmatpush.msra.mxu0 0.0
        %v1963 = vand.u32 %v616, 4294901760
        %1964 = vmatpush.msra.mxu0 %v1963
        %v1965 = vand.u32 %v1946, 4294901760
        %v1966 = vsub.f32 %v1946, %v1965
        %v1967 = vand.u32 %v1966, 4294901760
        %v1968 = vsub.f32 %v1966, %v1967
        %v1969 = vand.u32 %v1968, 4294901760
        %1970 = vmatmul.f32.gmra.mxu0 %v1969
        %v1971 = vpop.f32.mrf.mxu0
        %v1972 = vadd.f32 0.0, %v1971
        %1973 = vdwg.mxu0
        %1974 = vmatpush.msra.mxu0 0.0
        %1975 = vmatpush.msra.mxu0 0.0
        %1976 = vmatpush.msra.mxu0 0.0
        %1977 = vmatpush.msra.mxu0 0.0
        %1978 = vmatpush.msra.mxu0 0.0
        %1979 = vmatpush.msra.mxu0 0.0
        %1980 = vmatpush.msra.mxu0 0.0
        %1981 = vmatpush.msra.mxu0 0.0
        %1982 = vmatpush.msra.mxu0 0.0
        %1983 = vmatpush.msra.mxu0 0.0
        %1984 = vmatpush.msra.mxu0 0.0
        %1985 = vmatpush.msra.mxu0 0.0
        %1986 = vmatpush.msra.mxu0 0.0
        %1987 = vmatpush.msra.mxu0 0.0
        %1988 = vmatpush.msra.mxu0 0.0
        %v1989 = vand.u32 %v616, 4294901760
        %v1990 = vsub.f32 %v616, %v1989
        %v1991 = vand.u32 %v1990, 4294901760
        %v1992 = vsub.f32 %v1990, %v1991
        %v1993 = vand.u32 %v1992, 4294901760
        %1994 = vmatpush.msra.mxu0 %v1993
        %v1995 = vand.u32 %v1946, 4294901760
        %1996 = vmatmul.f32.gmra.mxu0 %v1995
        %v1997 = vpop.f32.mrf.mxu0
        %v1998 = vadd.f32 %v1972, %v1997
        %1999 = vdwg.mxu0
        %2000 = vmatpush.msra.mxu0 0.0
        %2001 = vmatpush.msra.mxu0 0.0
        %2002 = vmatpush.msra.mxu0 0.0
        %2003 = vmatpush.msra.mxu0 0.0
        %2004 = vmatpush.msra.mxu0 0.0
        %2005 = vmatpush.msra.mxu0 0.0
        %2006 = vmatpush.msra.mxu0 0.0
        %2007 = vmatpush.msra.mxu0 0.0
        %2008 = vmatpush.msra.mxu0 0.0
        %2009 = vmatpush.msra.mxu0 0.0
        %2010 = vmatpush.msra.mxu0 0.0
        %2011 = vmatpush.msra.mxu0 0.0
        %2012 = vmatpush.msra.mxu0 0.0
        %2013 = vmatpush.msra.mxu0 0.0
        %2014 = vmatpush.msra.mxu0 0.0
        %v2015 = vand.u32 %v616, 4294901760
        %v2016 = vsub.f32 %v616, %v2015
        %2017 = vmatpush.msra.mxu0 %v2016
        %v2018 = vand.u32 %v1946, 4294901760
        %v2019 = vsub.f32 %v1946, %v2018
        %2020 = vmatmul.f32.gmra.mxu0 %v2019
        %v2021 = vpop.f32.mrf.mxu0
        %v2022 = vadd.f32 %v1998, %v2021
        %2023 = vdwg.mxu0
        %2024 = vmatpush.msra.mxu0 0.0
        %2025 = vmatpush.msra.mxu0 0.0
        %2026 = vmatpush.msra.mxu0 0.0
        %2027 = vmatpush.msra.mxu0 0.0
        %2028 = vmatpush.msra.mxu0 0.0
        %2029 = vmatpush.msra.mxu0 0.0
        %2030 = vmatpush.msra.mxu0 0.0
        %2031 = vmatpush.msra.mxu0 0.0
        %2032 = vmatpush.msra.mxu0 0.0
        %2033 = vmatpush.msra.mxu0 0.0
        %2034 = vmatpush.msra.mxu0 0.0
        %2035 = vmatpush.msra.mxu0 0.0
        %2036 = vmatpush.msra.mxu0 0.0
        %2037 = vmatpush.msra.mxu0 0.0
        %2038 = vmatpush.msra.mxu0 0.0
        %v2039 = vand.u32 %v616, 4294901760
        %2040 = vmatpush.msra.mxu0 %v2039
        %v2041 = vand.u32 %v1946, 4294901760
        %v2042 = vsub.f32 %v1946, %v2041
        %v2043 = vand.u32 %v2042, 4294901760
        %2044 = vmatmul.f32.gmra.mxu0 %v2043
        %v2045 = vpop.f32.mrf.mxu0
        %v2046 = vadd.f32 %v2022, %v2045
        %2047 = vdwg.mxu0
        %2048 = vmatpush.msra.mxu0 0.0
        %2049 = vmatpush.msra.mxu0 0.0
        %2050 = vmatpush.msra.mxu0 0.0
        %2051 = vmatpush.msra.mxu0 0.0
        %2052 = vmatpush.msra.mxu0 0.0
        %2053 = vmatpush.msra.mxu0 0.0
        %2054 = vmatpush.msra.mxu0 0.0
        %2055 = vmatpush.msra.mxu0 0.0
        %2056 = vmatpush.msra.mxu0 0.0
        %2057 = vmatpush.msra.mxu0 0.0
        %2058 = vmatpush.msra.mxu0 0.0
        %2059 = vmatpush.msra.mxu0 0.0
        %2060 = vmatpush.msra.mxu0 0.0
        %2061 = vmatpush.msra.mxu0 0.0
        %2062 = vmatpush.msra.mxu0 0.0
        %v2063 = vand.u32 %v616, 4294901760
        %v2064 = vsub.f32 %v616, %v2063
        %v2065 = vand.u32 %v2064, 4294901760
        %2066 = vmatpush.msra.mxu0 %v2065
        %v2067 = vand.u32 %v1946, 4294901760
        %2068 = vmatmul.f32.gmra.mxu0 %v2067
        %v2069 = vpop.f32.mrf.mxu0
        %v2070 = vadd.f32 %v2046, %v2069
        %2071 = vdwg.mxu0
        %2072 = vmatpush.msra.mxu0 0.0
        %2073 = vmatpush.msra.mxu0 0.0
        %2074 = vmatpush.msra.mxu0 0.0
        %2075 = vmatpush.msra.mxu0 0.0
        %2076 = vmatpush.msra.mxu0 0.0
        %2077 = vmatpush.msra.mxu0 0.0
        %2078 = vmatpush.msra.mxu0 0.0
        %2079 = vmatpush.msra.mxu0 0.0
        %2080 = vmatpush.msra.mxu0 0.0
        %2081 = vmatpush.msra.mxu0 0.0
        %2082 = vmatpush.msra.mxu0 0.0
        %2083 = vmatpush.msra.mxu0 0.0
        %2084 = vmatpush.msra.mxu0 0.0
        %2085 = vmatpush.msra.mxu0 0.0
        %2086 = vmatpush.msra.mxu0 0.0
        %v2087 = vand.u32 %v616, 4294901760
        %2088 = vmatpush.msra.mxu0 %v2087
        %v2089 = vand.u32 %v1946, 4294901760
        %2090 = vmatmul.f32.gmra.mxu0 %v2089
        %v2091 = vpop.f32.mrf.mxu0
        %v2092 = vadd.f32 %v2070, %v2091
        %2093 = vdwg.mxu0
        %v2094 = vadd.f32 %v1944, %v2092
        %2095 = vst.msk [vmem:[#allocation4] sm:$0xff] %vm647, %v2094
        %v2096 = vld [vmem:[#allocation2] sm:$0xff]
        %v2097 = vmax.f32 %v1396, 0.0
        %v2098 = vmax.f32 %v1397, 0.0
        %v2099 = vmax.f32 %v1398, 0.0
        %v2100 = vmax.f32 %v1399, 0.0
        %v2101 = vmax.f32 %v1400, 0.0
        %v2102 = vmax.f32 %v1401, 0.0
        %v2103 = vmax.f32 %v1402, 0.0
        %v2104 = vmax.f32 %v1403, 0.0
        %v2105 = vmax.f32 %v1404, 0.0
        %v2106 = vmax.f32 %v1405, 0.0
        %v2107 = vmax.f32 %v1406, 0.0
        %v2108 = vmax.f32 %v1407, 0.0
        %v2109 = vmax.f32 %v1408, 0.0
        %v2110 = vmax.f32 %v1409, 0.0
        %v2111 = vmax.f32 %v1410, 0.0
        %v2112 = vmax.f32 %v1411, 0.0
        %v2113 = vmax.f32 %v1412, 0.0
        %v2114 = vmax.f32 %v1413, 0.0
        %v2115 = vmax.f32 %v1414, 0.0
        %v2116 = vmax.f32 %v1415, 0.0
        %v2117 = vmax.f32 %v1416, 0.0
        %v2118 = vmax.f32 %v1417, 0.0
        %v2119 = vmax.f32 %v1418, 0.0
        %v2120 = vmax.f32 %v1419, 0.0
        %v2121 = vmax.f32 %v1420, 0.0
        %v2122 = vmax.f32 %v1421, 0.0
        %v2123 = vmax.f32 %v1422, 0.0
        %v2124 = vmax.f32 %v1423, 0.0
        %v2125 = vmax.f32 %v1424, 0.0
        %v2126 = vmax.f32 %v1425, 0.0
        %v2127 = vmax.f32 %v1426, 0.0
        %v2128 = vmax.f32 %v1427, 0.0
        %v2129 = vmul.f32 %v2097, %v1911
        %v2130 = vmul.f32 %v2098, %v1911
        %v2131 = vmul.f32 %v2099, %v1911
        %v2132 = vmul.f32 %v2100, %v1911
        %v2133 = vmul.f32 %v2101, %v1911
        %v2134 = vmul.f32 %v2102, %v1911
        %v2135 = vmul.f32 %v2103, %v1911
        %v2136 = vmul.f32 %v2104, %v1911
        %v2137 = vmul.f32 %v2105, %v1911
        %v2138 = vmul.f32 %v2106, %v1911
        %v2139 = vmul.f32 %v2107, %v1911
        %v2140 = vmul.f32 %v2108, %v1911
        %v2141 = vmul.f32 %v2109, %v1911
        %v2142 = vmul.f32 %v2110, %v1911
        %v2143 = vmul.f32 %v2111, %v1911
        %v2144 = vmul.f32 %v2112, %v1911
        %v2145 = vmul.f32 %v2113, %v1911
        %v2146 = vmul.f32 %v2114, %v1911
        %v2147 = vmul.f32 %v2115, %v1911
        %v2148 = vmul.f32 %v2116, %v1911
        %v2149 = vmul.f32 %v2117, %v1911
        %v2150 = vmul.f32 %v2118, %v1911
        %v2151 = vmul.f32 %v2119, %v1911
        %v2152 = vmul.f32 %v2120, %v1911
        %v2153 = vmul.f32 %v2121, %v1911
        %v2154 = vmul.f32 %v2122, %v1911
        %v2155 = vmul.f32 %v2123, %v1911
        %v2156 = vmul.f32 %v2124, %v1911
        %v2157 = vmul.f32 %v2125, %v1911
        %v2158 = vmul.f32 %v2126, %v1911
        %v2159 = vmul.f32 %v2127, %v1911
        %v2160 = vmul.f32 %v2128, %v1911
        %v2161 = vsel %vm1644, %v2129, 0.0
        %2162 = vadd.xlane.f32.xlu0 %v2161
        %v2163 = vpop.xlane.xlu0 %2162
        %v2164 = vsel %vm1644, %v2130, 0.0
        %2165 = vadd.xlane.f32.xlu0 %v2164
        %v2166 = vpop.xlane.xlu0 %2165
        %v2167 = vsel %vm1644, %v2131, 0.0
        %2168 = vadd.xlane.f32.xlu0 %v2167
        %v2169 = vpop.xlane.xlu0 %2168
        %v2170 = vsel %vm1644, %v2132, 0.0
        %2171 = vadd.xlane.f32.xlu0 %v2170
        %v2172 = vpop.xlane.xlu0 %2171
        %v2173 = vsel %vm1644, %v2133, 0.0
        %2174 = vadd.xlane.f32.xlu0 %v2173
        %v2175 = vpop.xlane.xlu0 %2174
        %v2176 = vsel %vm1644, %v2134, 0.0
        %2177 = vadd.xlane.f32.xlu0 %v2176
        %v2178 = vpop.xlane.xlu0 %2177
        %v2179 = vsel %vm1644, %v2135, 0.0
        %2180 = vadd.xlane.f32.xlu0 %v2179
        %v2181 = vpop.xlane.xlu0 %2180
        %v2182 = vsel %vm1644, %v2136, 0.0
        %2183 = vadd.xlane.f32.xlu0 %v2182
        %v2184 = vpop.xlane.xlu0 %2183
        %v2185 = vsel %vm1644, %v2137, 0.0
        %2186 = vadd.xlane.f32.xlu0 %v2185
        %v2187 = vpop.xlane.xlu0 %2186
        %v2188 = vsel %vm1644, %v2138, 0.0
        %2189 = vadd.xlane.f32.xlu0 %v2188
        %v2190 = vpop.xlane.xlu0 %2189
        %v2191 = vsel %vm1644, %v2139, 0.0
        %2192 = vadd.xlane.f32.xlu0 %v2191
        %v2193 = vpop.xlane.xlu0 %2192
        %v2194 = vsel %vm1644, %v2140, 0.0
        %2195 = vadd.xlane.f32.xlu0 %v2194
        %v2196 = vpop.xlane.xlu0 %2195
        %v2197 = vsel %vm1644, %v2141, 0.0
        %2198 = vadd.xlane.f32.xlu0 %v2197
        %v2199 = vpop.xlane.xlu0 %2198
        %v2200 = vsel %vm1644, %v2142, 0.0
        %2201 = vadd.xlane.f32.xlu0 %v2200
        %v2202 = vpop.xlane.xlu0 %2201
        %v2203 = vsel %vm1644, %v2143, 0.0
        %2204 = vadd.xlane.f32.xlu0 %v2203
        %v2205 = vpop.xlane.xlu0 %2204
        %v2206 = vsel %vm1644, %v2144, 0.0
        %2207 = vadd.xlane.f32.xlu0 %v2206
        %v2208 = vpop.xlane.xlu0 %2207
        %v2209 = vsel %vm1644, %v2145, 0.0
        %2210 = vadd.xlane.f32.xlu0 %v2209
        %v2211 = vpop.xlane.xlu0 %2210
        %v2212 = vsel %vm1644, %v2146, 0.0
        %2213 = vadd.xlane.f32.xlu0 %v2212
        %v2214 = vpop.xlane.xlu0 %2213
        %v2215 = vsel %vm1644, %v2147, 0.0
        %2216 = vadd.xlane.f32.xlu0 %v2215
        %v2217 = vpop.xlane.xlu0 %2216
        %v2218 = vsel %vm1644, %v2148, 0.0
        %2219 = vadd.xlane.f32.xlu0 %v2218
        %v2220 = vpop.xlane.xlu0 %2219
        %v2221 = vsel %vm1644, %v2149, 0.0
        %2222 = vadd.xlane.f32.xlu0 %v2221
        %v2223 = vpop.xlane.xlu0 %2222
        %v2224 = vsel %vm1644, %v2150, 0.0
        %2225 = vadd.xlane.f32.xlu0 %v2224
        %v2226 = vpop.xlane.xlu0 %2225
        %v2227 = vsel %vm1644, %v2151, 0.0
        %2228 = vadd.xlane.f32.xlu0 %v2227
        %v2229 = vpop.xlane.xlu0 %2228
        %v2230 = vsel %vm1644, %v2152, 0.0
        %2231 = vadd.xlane.f32.xlu0 %v2230
        %v2232 = vpop.xlane.xlu0 %2231
        %v2233 = vsel %vm1644, %v2153, 0.0
        %2234 = vadd.xlane.f32.xlu0 %v2233
        %v2235 = vpop.xlane.xlu0 %2234
        %v2236 = vsel %vm1644, %v2154, 0.0
        %2237 = vadd.xlane.f32.xlu0 %v2236
        %v2238 = vpop.xlane.xlu0 %2237
        %v2239 = vsel %vm1644, %v2155, 0.0
        %2240 = vadd.xlane.f32.xlu0 %v2239
        %v2241 = vpop.xlane.xlu0 %2240
        %v2242 = vsel %vm1644, %v2156, 0.0
        %2243 = vadd.xlane.f32.xlu0 %v2242
        %v2244 = vpop.xlane.xlu0 %2243
        %v2245 = vsel %vm1644, %v2157, 0.0
        %2246 = vadd.xlane.f32.xlu0 %v2245
        %v2247 = vpop.xlane.xlu0 %2246
        %v2248 = vsel %vm1644, %v2158, 0.0
        %2249 = vadd.xlane.f32.xlu0 %v2248
        %v2250 = vpop.xlane.xlu0 %2249
        %v2251 = vsel %vm1644, %v2159, 0.0
        %2252 = vadd.xlane.f32.xlu0 %v2251
        %v2253 = vpop.xlane.xlu0 %2252
        %v2254 = vsel %vm1644, %v2160, 0.0
        %2255 = vadd.xlane.f32.xlu0 %v2254
        %v2256 = vpop.xlane.xlu0 %2255
        %v2289 = vlaneseq
        %v2290 = vand.u32 %v2289, 127
        %v2291 = vperm.slane %v2163, %v2290
        %v2292 = vadd.s32 %v2290, 4294967288
        %v2293 = vperm.slane %v2166, %v2292
        %vm2294 = vcmask 130112
        %v2295 = vsel %vm2294, %v2293, %v2291
        %v2296 = vadd.s32 %v2290, 4294967280
        %v2297 = vperm.slane %v2169, %v2296
        %vm2298 = vcmask 195712
        %v2299 = vsel %vm2298, %v2297, %v2295
        %v2300 = vadd.s32 %v2290, 4294967272
        %v2301 = vperm.slane %v2172, %v2300
        %vm2302 = vcmask 261312
        %v2303 = vsel %vm2302, %v2301, %v2299
        %v2304 = vperm.slane %v2175, %v2290
        %v2305 = vperm.slane %v2178, %v2292
        %v2306 = vsel %vm2294, %v2305, %v2304
        %v2307 = vperm.slane %v2181, %v2296
        %v2308 = vsel %vm2298, %v2307, %v2306
        %v2309 = vperm.slane %v2184, %v2300
        %v2310 = vsel %vm2302, %v2309, %v2308
        %v2311 = vperm.slane %v2187, %v2290
        %v2312 = vperm.slane %v2190, %v2292
        %v2313 = vsel %vm2294, %v2312, %v2311
        %v2314 = vperm.slane %v2193, %v2296
        %v2315 = vsel %vm2298, %v2314, %v2313
        %v2316 = vperm.slane %v2196, %v2300
        %v2317 = vsel %vm2302, %v2316, %v2315
        %v2318 = vperm.slane %v2199, %v2290
        %v2319 = vperm.slane %v2202, %v2292
        %v2320 = vsel %vm2294, %v2319, %v2318
        %v2321 = vperm.slane %v2205, %v2296
        %v2322 = vsel %vm2298, %v2321, %v2320
        %v2323 = vperm.slane %v2208, %v2300
        %v2324 = vsel %vm2302, %v2323, %v2322
        %v2325 = vperm.slane %v2211, %v2290
        %v2326 = vperm.slane %v2214, %v2292
        %v2327 = vsel %vm2294, %v2326, %v2325
        %v2328 = vperm.slane %v2217, %v2296
        %v2329 = vsel %vm2298, %v2328, %v2327
        %v2330 = vperm.slane %v2220, %v2300
        %v2331 = vsel %vm2302, %v2330, %v2329
        %v2332 = vperm.slane %v2223, %v2290
        %v2333 = vperm.slane %v2226, %v2292
        %v2334 = vsel %vm2294, %v2333, %v2332
        %v2335 = vperm.slane %v2229, %v2296
        %v2336 = vsel %vm2298, %v2335, %v2334
        %v2337 = vperm.slane %v2232, %v2300
        %v2338 = vsel %vm2302, %v2337, %v2336
        %v2339 = vperm.slane %v2235, %v2290
        %v2340 = vperm.slane %v2238, %v2292
        %v2341 = vsel %vm2294, %v2340, %v2339
        %v2342 = vperm.slane %v2241, %v2296
        %v2343 = vsel %vm2298, %v2342, %v2341
        %v2344 = vperm.slane %v2244, %v2300
        %v2345 = vsel %vm2302, %v2344, %v2343
        %v2346 = vperm.slane %v2247, %v2290
        %v2347 = vperm.slane %v2250, %v2292
        %v2348 = vsel %vm2294, %v2347, %v2346
        %v2349 = vperm.slane %v2253, %v2296
        %v2350 = vsel %vm2298, %v2349, %v2348
        %v2351 = vperm.slane %v2256, %v2300
        %v2352 = vsel %vm2302, %v2351, %v2350
        %v2353 = vsel %vm1921, %v2310, %v2303
        %v2354 = vsel %vm1923, %v2317, %v2353
        %v2355 = vsel %vm1925, %v2324, %v2354
        %v2356 = vsel %vm1927, %v2331, %v2355
        %v2357 = vsel %vm1929, %v2338, %v2356
        %v2358 = vsel %vm1931, %v2345, %v2357
        %v2359 = vsel %vm1933, %v2352, %v2358
        %v2361 = vadd.f32 %v2096, %v2359
        %vm2362 = vcmask 261120
        %2363 = vst.msk [vmem:[#allocation2] sm:$0xff] %vm2362, %v2361
        // Predicated region
        $region69: #{tpu_custom_call.1} parent=59 // pred_check
          %p2364 = pneg %p624
        $region70: #{tpu_custom_call.1} parent=59 // pred_check_branch
          %2366 = sbr.rel (%p2364) target = $region72
        $region71: #{tpu_custom_call.1} parent=59 // pred_region
          %v2367 = vld [vmem:[%s579] sm:$0xff]
          %v2368 = vld [vmem:[#allocation2] sm:$0xff]
          %2370 = vset.pattern.permute.xlu0 0
          %2371 = vperm.xlu0 %2370, %v2367
          %v2372 = vpop.permute.xlu0 %2371
          %v2374 = vmul.f32 %v2368, %v2372
          %2375 = vst.msk [vmem:[%s549] sm:$0xff] %vm2362, %v2374
          %v2376 = vld [vmem:[#allocation3] sm:$0xff]
          %v2377 = vstv %s643
          %v2378 = vmul.f32 %v2377, %v2376
          %2380 = vset.pattern.permute.xlu0 0
          %2381 = vperm.xlu0 %2380, %v2378
          %v2382 = vpop.permute.xlu0 %2381
          %v2384 = vmul.f32 %v2382, %v615
          %v2385 = vld [vmem:[#allocation4] sm:$0xff]
          %v2386 = vstv %s644
          %v2387 = vmul.f32 %v2386, %v2385
          %v2388 = vadd.f32 %v2384, %v2387
          %v2389 = vmul.f32 %v2388, %v2372
          %2390 = vst.msk [vmem:[%s614] sm:$0xff] %vm647, %v2389
        $region72: #{tpu_custom_call.1} parent=59 // pred_fallthru
          _
        %s2391 = sand.u32 %s315, 1
        %s2392 = scalar_lea.sflag [#allocation6], %s2391
        %s2393 = sand.u32 %s315, 1
        %s2394 = smul.addr %s2393, 8
        %s2395 = scalar_lea.vmem [#allocation8], %s2394
        %p2396 = scmp.lt.s32.totalorder %s32, 1
        %s2397 = scalar_select %p2396, %s32, 1
        %p2398 = scmp.lt.s32.totalorder %s33, 0
        %s2399 = scalar_select %p2398, %s33, 0
        %s2400 = sadd.s32 %s2399, %s2397
        %s2401 = smul.addr %s2400, 8
        %s2402 = scalar_lea.vmem %s11, %s2401
        // Predicated region
        $region73: #{tpu_custom_call.1} parent=59 // pred_check
          %p2403 = pneg %p325
        $region74: #{tpu_custom_call.1} parent=59 // pred_check_branch
          %2405 = sbr.rel (%p2403) target = $region76
        $region75: #{tpu_custom_call.1} parent=59 // pred_region
          %2407 = vsyncadd %s2392, 0
          %s2408 = sadd.s32 %s33, %s32
          %s2409 = smul.addr %s2408, 8
          %s2410 = scalar_lea.hbm %s10, %s2409
          %s2412 = sshll.u32 %s2395, 4
          %s2413 = int_to_ptr.vmem [resolvable:$true] %s2412
          %s2414 = sshll.u32 %s2410, 4
          %s2415 = int_to_ptr.hbm [resolvable:$true] %s2414
          %2417 = dma.vmem_to_hbm [thread:$0]  %s2413, 128, %s2415, %s2392
        $region76: #{tpu_custom_call.1} parent=59 // pred_fallthru
          _
        // Predicated region
        $region77: #{tpu_custom_call.1} parent=59 // pred_check
          %p2418 = pneg %p353
        $region78: #{tpu_custom_call.1} parent=59 // pred_check_branch
          %2420 = sbr.rel (%p2418) target = $region80
        $region79: #{tpu_custom_call.1} parent=59 // pred_region
          _
        $region80: #{tpu_custom_call.1} parent=59 // pred_fallthru
          _
      $region60: #{tpu_custom_call.1} parent=5 // pred_fallthru
        _
      %p2421 = scmp.le.s32.totalorder 2, %s22
      // Predicated region
      $region81: #{tpu_custom_call.1} parent=5 // pred_check
        %p2422 = pneg %p2421
      $region82: #{tpu_custom_call.1} parent=5 // pred_check_branch
        %2424 = sbr.rel (%p2422) target = $region84
      $region83: #{tpu_custom_call.1} parent=5 // pred_region
        %s2425 = ssub.s32 %s22, 2
        // Predicated region
        $region85: #{tpu_custom_call.1} parent=83 // pred_check
          %p2426 = pneg %p331
        $region86: #{tpu_custom_call.1} parent=83 // pred_check_branch
          %2428 = sbr.rel (%p2426) target = $region88
        $region87: #{tpu_custom_call.1} parent=83 // pred_region
          %s2429 = sand.u32 %s316, 1
          %s2430 = scalar_lea.sflag [#allocation6], %s2429
          %s2431 = sand.u32 %s316, 1
          %s2432 = smul.addr %s2431, 8
          %s2433 = scalar_lea.vmem [#allocation8], %s2432
          %2435 = dma.done %s2430, 128
        $region88: #{tpu_custom_call.1} parent=83 // pred_fallthru
          _
        // Predicated region
        $region89: #{tpu_custom_call.1} parent=83 // pred_check
          %p2436 = pneg %p359
        $region90: #{tpu_custom_call.1} parent=83 // pred_check_branch
          %2438 = sbr.rel (%p2436) target = $region92
        $region91: #{tpu_custom_call.1} parent=83 // pred_region
          %p2439 = scmp.lt.s32.totalorder %s35, 1
          %s2440 = scalar_select %p2439, %s35, 1
          %p2441 = scmp.lt.s32.totalorder %s36, 0
          %s2442 = scalar_select %p2441, %s36, 0
          %s2443 = sadd.s32 %s2442, %s2440
          %s2444 = smul.addr %s2443, 8
          %s2445 = scalar_lea.vmem %s11, %s2444
        $region92: #{tpu_custom_call.1} parent=83 // pred_fallthru
          _
      $region84: #{tpu_custom_call.1} parent=5 // pred_fallthru
        _
    $region6: #{tpu_custom_call.1} parent=1 // loop_footer
      %s26 = sadd.s32 1, %s22
    $region7: #{tpu_custom_call.1} parent=1 // loop_footer_branch
      %21 = sbr.rel target = $region3
    $region8: #{tpu_custom_call.1} parent=1 // loop_exit
      _
    %2446 = vsyncpa [#allocation6], 1
    %s2447 = scalar_lea.sflag [#allocation6], 1
    %2448 = vsyncpa %s2447, 1
    %2449 = vsyncpa [#allocation7], 1
    %s2450 = scalar_lea.sflag [#allocation7], 1
    %2451 = vsyncpa %s2450, 1

</llo_original>
